<compile_context>
chip_gen: v6e
topology: v6e:2x2x1
jax: 0.10.0
libtpu: 0.0.40
codegen_flags: <defaults>
</compile_context>

<pallas_src>
import jax
import jax.numpy as jnp
from jax.experimental import pallas as pl
from jax.experimental.pallas import tpu as pltpu

# --------------------------------------------------------------------------
# Configuration mirroring the PyTorch module
# --------------------------------------------------------------------------
ACTION_OPTIONS = ("noop", "forward", "left", "right")
NUM_ACTIONS = len(ACTION_OPTIONS)                 # 4

C_IN, H_IN, W_IN = 4, 16, 16                      # visual input (C, H, W), NCHW
NV_IN = 8                                         # non-visual input width
KH1 = KW1 = 5
OC1 = 16
KH2 = KW2 = 3
OC2 = 8
NV_DENSE = 8
ENC = 126                                         # encoding_size
ENC_PAD = 128                                     # lane-padded dense1 width

OH1, OW1 = H_IN - KH1 + 1, W_IN - KW1 + 1         # 12, 12
OH2, OW2 = OH1 - KH2 + 1, OW1 - KW2 + 1           # 10, 10
FLAT = OC2 * OH2 * OW2                            # 800  (torch CHW flatten)

L1 = W_IN * C_IN                                  # 64   conv1 channels-last row width
K1 = KH1 * L1                                     # 320  conv1 im2col K (KH folded in)
N1 = OW1 * OC1                                    # 192  conv1 output row width
N1P = 256                                         # lane-padded conv1 row width
N2 = OW2 * OC2                                    # 80   conv2 output row width
N2P = 128                                         # lane-padded conv2 row width


def _round_up(x, m):
    return (x + m - 1) // m * m


# --------------------------------------------------------------------------
# Fused forward kernel: one grid step == one block of BB batch elements
# --------------------------------------------------------------------------
def _qnet_kernel(x1_ref, nv_ref, w1_ref, b1_ref, w2_ref, b2_ref,
                 wnv_ref, bnv_ref, w1c_ref, w1nv_ref, b1d_ref,
                 w2d_ref, b2d_ref, out_ref, c1_ref, c2w_ref):
    cdt = w1_ref.dtype                             # compute dtype (f32 or bf16)
    BB = nv_ref.shape[0]                           # batch block size
    M2 = OH2 * BB

    # conv1 + ReLU: ONE matmul; KH folded into K by the wrapper-side im2col.
    # Rows are oh-major (row = oh*BB + b).
    c1 = jnp.dot(x1_ref[...], w1_ref[...], preferred_element_type=jnp.float32)
    c1 = jnp.maximum(c1 + b1_ref[...], 0.0)
    c1_ref[...] = c1.astype(cdt)                   # (OH1*BB, N1P) VMEM scratch

    # conv2 + ReLU: KH2 shifted-slab matmuls, slicing the scratch REF at
    # sublane-tile-aligned offsets kh*BB (offsets are multiples of 8).
    acc2 = jnp.dot(c1_ref[0:M2, :], w2_ref[0],
                   preferred_element_type=jnp.float32)
    acc2 = acc2 + jnp.dot(c1_ref[BB:BB + M2, :], w2_ref[1],
                          preferred_element_type=jnp.float32)
    acc2 = acc2 + jnp.dot(c1_ref[2 * BB:2 * BB + M2, :], w2_ref[2],
                          preferred_element_type=jnp.float32)
    c2 = jnp.maximum(acc2 + b2_ref[...], 0.0).astype(cdt)        # (OH2*BB, N2P)

    # Re-pack conv2 output per batch row: lane slot oh*128.. holds output row oh.
    # All slices / stores are tile-aligned (sublane offsets oh*BB, lane offsets
    # oh*128), so this is plain vld/vst plumbing feeding one big dense1 matmul.
    for oh in range(OH2):
        c2w_ref[:, oh * N2P:(oh + 1) * N2P] = c2[oh * BB:(oh + 1) * BB, :]

    # Non-visual dense + ReLU.
    nvd = jnp.dot(nv_ref[...], wnv_ref[...],
                  preferred_element_type=jnp.float32) + bnv_ref[...]
    nvd = jnp.maximum(nvd, 0.0).astype(cdt)                      # (BB, NV_DENSE)

    # dense1 + ReLU: ONE (BB, OH2*128) @ (OH2*128, 128) matmul for the conv
    # columns (CHW->HWC permutation and all padding baked into w1c), plus the
    # small non-visual contribution.
    hid = jnp.dot(nvd, w1nv_ref[...],
                  preferred_element_type=jnp.float32) + b1d_ref[...]
    hid = hid + jnp.dot(c2w_ref[...], w1c_ref[...],
                        preferred_element_type=jnp.float32)
    hid = jnp.maximum(hid, 0.0).astype(cdt)                      # (BB, ENC_PAD)

    # dense2 (no activation).
    out = jnp.dot(hid, w2d_ref[...],
                  preferred_element_type=jnp.float32) + b2d_ref[...]
    out_ref[...] = out.astype(out_ref.dtype)                     # (BB, NUM_ACTIONS)


# --------------------------------------------------------------------------
# One-time weight re-layout (done OUTSIDE the jitted forward)
# --------------------------------------------------------------------------
def _banded_conv_weight(w_torch, w_in):
    """torch Conv2d weight (OC, IC, KH, KW) -> (KH, w_in*IC, w_out*OC) banded
    matrices M with M[kh][w*IC + c, ow*OC + oc] = w[oc, c, kh, w - ow]."""
    oc, ic, khs, kws = w_torch.shape
    w_out = w_in - kws + 1
    sel = (jnp.arange(w_in)[:, None, None]
           == jnp.arange(w_out)[None, None, :] + jnp.arange(kws)[None, :, None])
    sel = sel.astype(jnp.float32)                       # (w_in, KW, w_out)
    wk = jnp.transpose(w_torch, (2, 3, 1, 0)).astype(jnp.float32)  # (KH,KW,IC,OC)
    z = jnp.einsum("wko,hkcd->hwcod", sel, wk)          # (KH, w_in, IC, w_out, OC)
    return z.reshape(khs, w_in * ic, w_out * oc)


def prepare_params(params, compute_dtype=jnp.float32):
    f32 = jnp.float32
    # conv1: fold KH into K (320 rows) and pad N 192 -> 256 (lane-dense).
    w1 = _banded_conv_weight(params["conv1_w"], W_IN).reshape(K1, N1)
    w1 = jnp.pad(w1, ((0, 0), (0, N1P - N1))).astype(compute_dtype)
    b1 = jnp.pad(jnp.tile(params["conv1_b"].astype(f32), OW1),
                 (0, N1P - N1)).reshape(1, N1P)
    # conv2: per-kh banded matrices, pad K 192 -> 256 and N 80 -> 128.
    w2 = _banded_conv_weight(params["conv2_w"], OW1)              # (3, 192, 80)
    w2 = jnp.pad(w2, ((0, 0), (0, N1P - N1), (0, N2P - N2))).astype(compute_dtype)
    b2 = jnp.pad(jnp.tile(params["conv2_b"].astype(f32), OW2),
                 (0, N2P - N2)).reshape(1, N2P)
    # non-visual dense.
    wnv = params["nonvis_w"].T.astype(compute_dtype)              # (NV_IN, NV_DENSE)
    bnv = params["nonvis_b"].astype(f32).reshape(1, NV_DENSE)
    # dense1 conv columns: torch flatten order is (oc, oh, ow); permute to the
    # kernel's per-oh (ow, oc) lane order, pad 80 -> 128 rows per oh-slot and
    # 126 -> 128 output lanes, then flatten to ONE (OH2*128, 128) matrix.
    w1c = params["dense1_w"][:, :FLAT].reshape(ENC, OC2, OH2, OW2)
    w1c = jnp.transpose(w1c, (2, 3, 1, 0)).reshape(OH2, N2, ENC)
    w1c = jnp.pad(w1c, ((0, 0), (0, N2P - N2), (0, ENC_PAD - ENC)))
    w1c = w1c.reshape(OH2 * N2P, ENC_PAD).astype(compute_dtype)
    w1nv = jnp.pad(params["dense1_w"][:, FLAT:].T,
                   ((0, 0), (0, ENC_PAD - ENC))).astype(compute_dtype)
    b1d = jnp.pad(params["dense1_b"].astype(f32),
                  (0, ENC_PAD - ENC)).reshape(1, ENC_PAD)
    # dense2.
    w2d = jnp.pad(params["dense2_w"].T,
                  ((0, ENC_PAD - ENC), (0, 0))).astype(compute_dtype)
    b2d = params["dense2_b"].astype(f32).reshape(1, NUM_ACTIONS)
    return {"w1": w1, "b1": b1, "w2": w2, "b2": b2, "wnv": wnv, "bnv": bnv,
            "w1c": w1c, "w1nv": w1nv, "b1d": b1d, "w2d": w2d, "b2d": b2d}


# --------------------------------------------------------------------------
# Forward pass (matches QNetwork.forward)
# --------------------------------------------------------------------------
def qnetwork_forward(prep, visual_obs, nonvis_obs, block_batch=32):
    """visual_obs: (B, C, H, W) NCHW; nonvis_obs: (B, NV_IN).  Returns (B, 4)."""
    B = visual_obs.shape[0]
    cdt = prep["w1"].dtype

    # Batch block size: multiple of 8, at most block_batch, no bigger than the
    # (rounded-up) batch.  On v7x pick block_batch <= B/2 so the grid has >= 2
    # parallel steps and both TensorCores are used.
    BB = min(_round_up(block_batch, 8), _round_up(B, 8))
    B_pad = _round_up(B, BB)
    NG = B_pad // BB

    x = visual_obs.astype(cdt)
    nv = nonvis_obs.reshape(-1, NV_IN).astype(cdt)
    if B_pad != B:
        x = jnp.pad(x, ((0, B_pad - B), (0, 0), (0, 0), (0, 0)))
        nv = jnp.pad(nv, ((0, B_pad - B), (0, 0)))

    # Entry relayout (cheap XLA, once per call): NCHW -> channels-last rows,
    # conv1 row-im2col (KH folded into lanes), and oh-major row order within
    # each batch block so every in-kernel slab slice is a contiguous,
    # tile-aligned ref window.
    xr = jnp.transpose(x, (0, 2, 3, 1)).reshape(B_pad, H_IN, L1)
    lhs1 = jnp.concatenate([xr[:, kh:kh + OH1, :] for kh in range(KH1)], axis=-1)
    lhs1 = lhs1.reshape(NG, BB, OH1, K1).transpose(0, 2, 1, 3)
    lhs1 = lhs1.reshape(NG * OH1 * BB, K1)

    operands = (lhs1, nv, prep["w1"], prep["b1"], prep["w2"], prep["b2"],
                prep["wnv"], prep["bnv"], prep["w1c"], prep["w1nv"],
                prep["b1d"], prep["w2d"], prep["b2d"])

    def _const_spec(a):                      # whole-array block, fetched once
        nd = a.ndim
        return pl.BlockSpec(a.shape, lambda i, nd=nd: (0,) * nd)

    in_specs = [
        pl.BlockSpec((OH1 * BB, K1), lambda i: (i, 0)),       # conv1 im2col rows
        pl.BlockSpec((BB, NV_IN), lambda i: (i, 0)),          # nonvis rows
    ] + [_const_spec(a) for a in operands[2:]]

    macs = (OH1 * OW1 * OC1 * C_IN * KH1 * KW1
            + OH2 * OW2 * OC2 * OC1 * KH2 * KW2
            + NV_DENSE * NV_IN
            + ENC * (FLAT + NV_DENSE)
            + NUM_ACTIONS * ENC)
    flops = 2 * B_pad * macs
    bytes_accessed = (sum(a.size * a.dtype.itemsize for a in operands)
                      + B_pad * NUM_ACTIONS * 4)

    out = pl.pallas_call(
        _qnet_kernel,
        grid=(NG,),
        out_shape=jax.ShapeDtypeStruct((B_pad, NUM_ACTIONS), jnp.float32),
        in_specs=in_specs,
        out_specs=pl.BlockSpec((BB, NUM_ACTIONS), lambda i: (i, 0)),
        scratch_shapes=[pltpu.VMEM((OH1 * BB, N1P), cdt),     # conv1 activations
                        pltpu.VMEM((BB, OH2 * N2P), cdt)],    # conv2, lane-packed
        compiler_params=pltpu.CompilerParams(
            dimension_semantics=("parallel",)),   # shard batch blocks over TCs
        cost_estimate=pl.CostEstimate(flops=flops, transcendentals=0,
                                      bytes_accessed=bytes_accessed),
    )(*operands)
    return out[:B]


# --------------------------------------------------------------------------
# Parameter init (deterministic, torch layouts) and pure-JAX reference
# --------------------------------------------------------------------------
def init_params(key):
    ks = jax.random.split(key, 10)
    return {
        "conv1_w": jax.random.normal(ks[0], (OC1, C_IN, KH1, KW1), jnp.float32) * 0.05,
        "conv1_b": jax.random.normal(ks[1], (OC1,), jnp.float32) * 0.05,
        "conv2_w": jax.random.normal(ks[2], (OC2, OC1, KH2, KW2), jnp.float32) * 0.05,
        "conv2_b": jax.random.normal(ks[3], (OC2,), jnp.float32) * 0.05,
        "nonvis_w": jax.random.normal(ks[4], (NV_DENSE, NV_IN), jnp.float32) * 0.1,
        "nonvis_b": jax.random.normal(ks[5], (NV_DENSE,), jnp.float32) * 0.1,
        "dense1_w": jax.random.normal(ks[6], (ENC, FLAT + NV_DENSE), jnp.float32) * 0.02,
        "dense1_b": jax.random.normal(ks[7], (ENC,), jnp.float32) * 0.02,
        "dense2_w": jax.random.normal(ks[8], (NUM_ACTIONS, ENC), jnp.float32) * 0.05,
        "dense2_b": jax.random.normal(ks[9], (NUM_ACTIONS,), jnp.float32) * 0.05,
    }


def qnetwork_forward_ref(params, visual_obs, nonvis_obs):
    B = visual_obs.shape[0]
    nonvis = nonvis_obs.reshape(-1, NV_IN)

    def conv(x, w, b):
        y = jax.lax.conv_general_dilated(
            x, w, window_strides=(1, 1), padding="VALID",
            dimension_numbers=("NCHW", "OIHW", "NCHW"))
        return jnp.maximum(y + b[None, :, None, None], 0.0)

    c1 = conv(visual_obs, params["conv1_w"], params["conv1_b"])
    c2 = conv(c1, params["conv2_w"], params["conv2_b"])
    nv = jnp.maximum(nonvis @ params["nonvis_w"].T + params["nonvis_b"], 0.0)
    h = jnp.concatenate([c2.reshape(B, FLAT), nv], axis=1)
    h = jnp.maximum(h @ params["dense1_w"].T + params["dense1_b"], 0.0)
    return h @ params["dense2_w"].T + params["dense2_b"]


# --------------------------------------------------------------------------
if __name__ == "__main__":
    key = jax.random.PRNGKey(0)
    kp, kv, kn, kv2, kn2 = jax.random.split(key, 5)

    params = init_params(kp)
    fwd = jax.jit(qnetwork_forward, static_argnames=("block_batch",))

    # Small batch (B=2): padded internally to one BB=8 block.
    B = 2
    visual_obs = jax.random.normal(kv, (B, C_IN, H_IN, W_IN), jnp.float32)
    nonvis_obs = jax.random.normal(kn, (B, NV_IN), jnp.float32)
    ref = qnetwork_forward_ref(params, visual_obs, nonvis_obs)

    prep_f32 = prepare_params(params, jnp.float32)
    out = jax.block_until_ready(fwd(prep_f32, visual_obs, nonvis_obs))
    assert out.shape == (B, NUM_ACTIONS), out.shape
    assert jnp.allclose(out, ref, atol=3e-3, rtol=3e-3), (out, ref)

    # Larger batch exercising a multi-step ("parallel") batch-blocked grid.
    B2 = 64
    v2 = jax.random.normal(kv2, (B2, C_IN, H_IN, W_IN), jnp.float32)
    n2 = jax.random.normal(kn2, (B2, NV_IN), jnp.float32)
    ref2 = qnetwork_forward_ref(params, v2, n2)
    out2 = jax.block_until_ready(fwd(prep_f32, v2, n2, block_batch=32))
    assert out2.shape == (B2, NUM_ACTIONS), out2.shape
    assert jnp.allclose(out2, ref2, atol=3e-3, rtol=3e-3), (out2, ref2)

    # bfloat16 operands (MXU-native on v6e/v7x), float32 accumulation.
    prep_bf16 = prepare_params(params, jnp.bfloat16)
    out_bf16 = jax.block_until_ready(fwd(prep_bf16, visual_obs, nonvis_obs))
    assert out_bf16.shape == (B, NUM_ACTIONS)
    assert jnp.allclose(out_bf16, ref, atol=1.5e-1, rtol=1.5e-1), (out_bf16, ref)

    print("KERNEL_OK")
</pallas_src>

<mosaic_0001>
module attributes {stable_mosaic.version = 11 : i64} {
  func.func @_qnet_kernel(%arg0: i32, %arg1: memref<96x320xf32, #tpu.memory_space<vmem>>, %arg2: memref<8x8xf32, #tpu.memory_space<vmem>>, %arg3: memref<320x256xf32, #tpu.memory_space<vmem>>, %arg4: memref<1x256xf32, #tpu.memory_space<vmem>>, %arg5: memref<3x256x128xf32, #tpu.memory_space<vmem>>, %arg6: memref<1x128xf32, #tpu.memory_space<vmem>>, %arg7: memref<8x8xf32, #tpu.memory_space<vmem>>, %arg8: memref<1x8xf32, #tpu.memory_space<vmem>>, %arg9: memref<1280x128xf32, #tpu.memory_space<vmem>>, %arg10: memref<8x128xf32, #tpu.memory_space<vmem>>, %arg11: memref<1x128xf32, #tpu.memory_space<vmem>>, %arg12: memref<128x4xf32, #tpu.memory_space<vmem>>, %arg13: memref<1x4xf32, #tpu.memory_space<vmem>>, %arg14: memref<8x4xf32, #tpu.memory_space<vmem>>, %arg15: memref<96x256xf32, #tpu.memory_space<vmem>>, %arg16: memref<8x1280xf32, #tpu.memory_space<vmem>>) attributes {dimension_semantics = [#tpu.dimension_semantics<parallel>], iteration_bounds = array<i64: 1>, scalar_prefetch = 0 : i64, scratch_operands = 2 : i64, tpu.core_type = #tpu.core_type<tc>, window_params = [{transform_indices = @transform_0, window_bounds = array<i64: 96, 320>}, {transform_indices = @transform_1, window_bounds = array<i64: 8, 8>}, {pipeline_mode = #tpu.pipeline_mode<synchronous>, transform_indices = @transform_2, window_bounds = array<i64: 320, 256>}, {pipeline_mode = #tpu.pipeline_mode<synchronous>, transform_indices = @transform_3, window_bounds = array<i64: 1, 256>}, {pipeline_mode = #tpu.pipeline_mode<synchronous>, transform_indices = @transform_4, window_bounds = array<i64: 3, 256, 128>}, {pipeline_mode = #tpu.pipeline_mode<synchronous>, transform_indices = @transform_5, window_bounds = array<i64: 1, 128>}, {pipeline_mode = #tpu.pipeline_mode<synchronous>, transform_indices = @transform_6, window_bounds = array<i64: 8, 8>}, {pipeline_mode = #tpu.pipeline_mode<synchronous>, transform_indices = @transform_7, window_bounds = array<i64: 1, 8>}, {pipeline_mode = #tpu.pipeline_mode<synchronous>, transform_indices = @transform_8, window_bounds = array<i64: 1280, 128>}, {pipeline_mode = #tpu.pipeline_mode<synchronous>, transform_indices = @transform_9, window_bounds = array<i64: 8, 128>}, {pipeline_mode = #tpu.pipeline_mode<synchronous>, transform_indices = @transform_10, window_bounds = array<i64: 1, 128>}, {pipeline_mode = #tpu.pipeline_mode<synchronous>, transform_indices = @transform_11, window_bounds = array<i64: 128, 4>}, {pipeline_mode = #tpu.pipeline_mode<synchronous>, transform_indices = @transform_12, window_bounds = array<i64: 1, 4>}, {transform_indices = @transform_13, window_bounds = array<i64: 8, 4>}]} {
    %c0 = arith.constant 0 : index
    %c0_0 = arith.constant 0 : index
    %0 = vector.load %arg1[%c0, %c0_0] : memref<96x320xf32, #tpu.memory_space<vmem>>, vector<96x320xf32>
    %c0_1 = arith.constant 0 : index
    %c0_2 = arith.constant 0 : index
    %1 = vector.load %arg3[%c0_1, %c0_2] : memref<320x256xf32, #tpu.memory_space<vmem>>, vector<320x256xf32>
    %cst = arith.constant dense<0.000000e+00> : vector<96x256xf32>
    %2 = tpu.matmul %0, %1, %cst {dimension_numbers = #tpu.dot_dimension_numbers<[1], [0], [0], [1], [0, 0, 1, 1], [], []>} : vector<96x320xf32>, vector<320x256xf32>, vector<96x256xf32> -> vector<96x256xf32>
    %c0_3 = arith.constant 0 : index
    %c0_4 = arith.constant 0 : index
    %3 = vector.load %arg4[%c0_3, %c0_4] : memref<1x256xf32, #tpu.memory_space<vmem>>, vector<1x256xf32>
    %4 = vector.broadcast %3 : vector<1x256xf32> to vector<96x256xf32>
    %5 = arith.addf %2, %4 : vector<96x256xf32>
    %cst_5 = arith.constant 0.000000e+00 : f32
    %6 = vector.broadcast %cst_5 : f32 to vector<96x256xf32>
    %7 = arith.maximumf %5, %6 : vector<96x256xf32>
    %c0_6 = arith.constant 0 : index
    %c0_7 = arith.constant 0 : index
    %8 = vector.load %arg15[%c0_6, %c0_7] : memref<96x256xf32, #tpu.memory_space<vmem>>, vector<96x256xf32>
    tpu.vector_store %arg15[%c0_6, %c0_7], %7 {strides = array<i32>} : memref<96x256xf32, #tpu.memory_space<vmem>>, vector<96x256xf32>,
    %c0_8 = arith.constant 0 : index
    %c0_9 = arith.constant 0 : index
    %9 = vector.load %arg15[%c0_8, %c0_9] : memref<96x256xf32, #tpu.memory_space<vmem>>, vector<80x256xf32>
    %c0_10 = arith.constant 0 : index
    %c0_11 = arith.constant 0 : index
    %c0_12 = arith.constant 0 : index
    %10 = vector.load %arg5[%c0_10, %c0_11, %c0_12] : memref<3x256x128xf32, #tpu.memory_space<vmem>>, vector<1x256x128xf32>
    %11 = vector.shape_cast %10 : vector<1x256x128xf32> to vector<256x128xf32>
    %cst_13 = arith.constant dense<0.000000e+00> : vector<80x128xf32>
    %12 = tpu.matmul %9, %11, %cst_13 {dimension_numbers = #tpu.dot_dimension_numbers<[1], [0], [0], [1], [0, 0, 1, 1], [], []>} : vector<80x256xf32>, vector<256x128xf32>, vector<80x128xf32> -> vector<80x128xf32>
    %c8 = arith.constant 8 : index
    %c0_14 = arith.constant 0 : index
    %13 = vector.load %arg15[%c8, %c0_14] : memref<96x256xf32, #tpu.memory_space<vmem>>, vector<80x256xf32>
    %c1 = arith.constant 1 : index
    %c0_15 = arith.constant 0 : index
    %c0_16 = arith.constant 0 : index
    %14 = vector.load %arg5[%c1, %c0_15, %c0_16] : memref<3x256x128xf32, #tpu.memory_space<vmem>>, vector<1x256x128xf32>
    %15 = vector.shape_cast %14 : vector<1x256x128xf32> to vector<256x128xf32>
    %cst_17 = arith.constant dense<0.000000e+00> : vector<80x128xf32>
    %16 = tpu.matmul %13, %15, %cst_17 {dimension_numbers = #tpu.dot_dimension_numbers<[1], [0], [0], [1], [0, 0, 1, 1], [], []>} : vector<80x256xf32>, vector<256x128xf32>, vector<80x128xf32> -> vector<80x128xf32>
    %17 = arith.addf %12, %16 : vector<80x128xf32>
    %c16 = arith.constant 16 : index
    %c0_18 = arith.constant 0 : index
    %18 = vector.load %arg15[%c16, %c0_18] : memref<96x256xf32, #tpu.memory_space<vmem>>, vector<80x256xf32>
    %c2 = arith.constant 2 : index
    %c0_19 = arith.constant 0 : index
    %c0_20 = arith.constant 0 : index
    %19 = vector.load %arg5[%c2, %c0_19, %c0_20] : memref<3x256x128xf32, #tpu.memory_space<vmem>>, vector<1x256x128xf32>
    %20 = vector.shape_cast %19 : vector<1x256x128xf32> to vector<256x128xf32>
    %cst_21 = arith.constant dense<0.000000e+00> : vector<80x128xf32>
    %21 = tpu.matmul %18, %20, %cst_21 {dimension_numbers = #tpu.dot_dimension_numbers<[1], [0], [0], [1], [0, 0, 1, 1], [], []>} : vector<80x256xf32>, vector<256x128xf32>, vector<80x128xf32> -> vector<80x128xf32>
    %22 = arith.addf %17, %21 : vector<80x128xf32>
    %c0_22 = arith.constant 0 : index
    %c0_23 = arith.constant 0 : index
    %23 = vector.load %arg6[%c0_22, %c0_23] : memref<1x128xf32, #tpu.memory_space<vmem>>, vector<1x128xf32>
    %24 = vector.broadcast %23 : vector<1x128xf32> to vector<80x128xf32>
    %25 = arith.addf %22, %24 : vector<80x128xf32>
    %cst_24 = arith.constant 0.000000e+00 : f32
    %26 = vector.broadcast %cst_24 : f32 to vector<80x128xf32>
    %27 = arith.maximumf %25, %26 : vector<80x128xf32>
    %28 = vector.extract_strided_slice %27 {offsets = [0, 0], sizes = [8, 128], strides = [1, 1]} : vector<80x128xf32> to vector<8x128xf32>
    %c0_25 = arith.constant 0 : index
    %c0_26 = arith.constant 0 : index
    %29 = vector.load %arg16[%c0_25, %c0_26] : memref<8x1280xf32, #tpu.memory_space<vmem>>, vector<8x128xf32>
    tpu.vector_store %arg16[%c0_25, %c0_26], %28 {strides = array<i32>} : memref<8x1280xf32, #tpu.memory_space<vmem>>, vector<8x128xf32>,
    %30 = vector.extract_strided_slice %27 {offsets = [8, 0], sizes = [8, 128], strides = [1, 1]} : vector<80x128xf32> to vector<8x128xf32>
    %c0_27 = arith.constant 0 : index
    %c128 = arith.constant 128 : index
    %31 = vector.load %arg16[%c0_27, %c128] : memref<8x1280xf32, #tpu.memory_space<vmem>>, vector<8x128xf32>
    tpu.vector_store %arg16[%c0_27, %c128], %30 {strides = array<i32>} : memref<8x1280xf32, #tpu.memory_space<vmem>>, vector<8x128xf32>,
    %32 = vector.extract_strided_slice %27 {offsets = [16, 0], sizes = [8, 128], strides = [1, 1]} : vector<80x128xf32> to vector<8x128xf32>
    %c0_28 = arith.constant 0 : index
    %c256 = arith.constant 256 : index
    %33 = vector.load %arg16[%c0_28, %c256] : memref<8x1280xf32, #tpu.memory_space<vmem>>, vector<8x128xf32>
    tpu.vector_store %arg16[%c0_28, %c256], %32 {strides = array<i32>} : memref<8x1280xf32, #tpu.memory_space<vmem>>, vector<8x128xf32>,
    %34 = vector.extract_strided_slice %27 {offsets = [24, 0], sizes = [8, 128], strides = [1, 1]} : vector<80x128xf32> to vector<8x128xf32>
    %c0_29 = arith.constant 0 : index
    %c384 = arith.constant 384 : index
    %35 = vector.load %arg16[%c0_29, %c384] : memref<8x1280xf32, #tpu.memory_space<vmem>>, vector<8x128xf32>
    tpu.vector_store %arg16[%c0_29, %c384], %34 {strides = array<i32>} : memref<8x1280xf32, #tpu.memory_space<vmem>>, vector<8x128xf32>,
    %36 = vector.extract_strided_slice %27 {offsets = [32, 0], sizes = [8, 128], strides = [1, 1]} : vector<80x128xf32> to vector<8x128xf32>
    %c0_30 = arith.constant 0 : index
    %c512 = arith.constant 512 : index
    %37 = vector.load %arg16[%c0_30, %c512] : memref<8x1280xf32, #tpu.memory_space<vmem>>, vector<8x128xf32>
    tpu.vector_store %arg16[%c0_30, %c512], %36 {strides = array<i32>} : memref<8x1280xf32, #tpu.memory_space<vmem>>, vector<8x128xf32>,
    %38 = vector.extract_strided_slice %27 {offsets = [40, 0], sizes = [8, 128], strides = [1, 1]} : vector<80x128xf32> to vector<8x128xf32>
    %c0_31 = arith.constant 0 : index
    %c640 = arith.constant 640 : index
    %39 = vector.load %arg16[%c0_31, %c640] : memref<8x1280xf32, #tpu.memory_space<vmem>>, vector<8x128xf32>
    tpu.vector_store %arg16[%c0_31, %c640], %38 {strides = array<i32>} : memref<8x1280xf32, #tpu.memory_space<vmem>>, vector<8x128xf32>,
    %40 = vector.extract_strided_slice %27 {offsets = [48, 0], sizes = [8, 128], strides = [1, 1]} : vector<80x128xf32> to vector<8x128xf32>
    %c0_32 = arith.constant 0 : index
    %c768 = arith.constant 768 : index
    %41 = vector.load %arg16[%c0_32, %c768] : memref<8x1280xf32, #tpu.memory_space<vmem>>, vector<8x128xf32>
    tpu.vector_store %arg16[%c0_32, %c768], %40 {strides = array<i32>} : memref<8x1280xf32, #tpu.memory_space<vmem>>, vector<8x128xf32>,
    %42 = vector.extract_strided_slice %27 {offsets = [56, 0], sizes = [8, 128], strides = [1, 1]} : vector<80x128xf32> to vector<8x128xf32>
    %c0_33 = arith.constant 0 : index
    %c896 = arith.constant 896 : index
    %43 = vector.load %arg16[%c0_33, %c896] : memref<8x1280xf32, #tpu.memory_space<vmem>>, vector<8x128xf32>
    tpu.vector_store %arg16[%c0_33, %c896], %42 {strides = array<i32>} : memref<8x1280xf32, #tpu.memory_space<vmem>>, vector<8x128xf32>,
    %44 = vector.extract_strided_slice %27 {offsets = [64, 0], sizes = [8, 128], strides = [1, 1]} : vector<80x128xf32> to vector<8x128xf32>
    %c0_34 = arith.constant 0 : index
    %c1024 = arith.constant 1024 : index
    %45 = vector.load %arg16[%c0_34, %c1024] : memref<8x1280xf32, #tpu.memory_space<vmem>>, vector<8x128xf32>
    tpu.vector_store %arg16[%c0_34, %c1024], %44 {strides = array<i32>} : memref<8x1280xf32, #tpu.memory_space<vmem>>, vector<8x128xf32>,
    %46 = vector.extract_strided_slice %27 {offsets = [72, 0], sizes = [8, 128], strides = [1, 1]} : vector<80x128xf32> to vector<8x128xf32>
    %c0_35 = arith.constant 0 : index
    %c1152 = arith.constant 1152 : index
    %47 = vector.load %arg16[%c0_35, %c1152] : memref<8x1280xf32, #tpu.memory_space<vmem>>, vector<8x128xf32>
    tpu.vector_store %arg16[%c0_35, %c1152], %46 {strides = array<i32>} : memref<8x1280xf32, #tpu.memory_space<vmem>>, vector<8x128xf32>,
    %c0_36 = arith.constant 0 : index
    %c0_37 = arith.constant 0 : index
    %48 = vector.load %arg2[%c0_36, %c0_37] : memref<8x8xf32, #tpu.memory_space<vmem>>, vector<8x8xf32>
    %c0_38 = arith.constant 0 : index
    %c0_39 = arith.constant 0 : index
    %49 = vector.load %arg7[%c0_38, %c0_39] : memref<8x8xf32, #tpu.memory_space<vmem>>, vector<8x8xf32>
    %cst_40 = arith.constant dense<0.000000e+00> : vector<8x8xf32>
    %50 = tpu.matmul %48, %49, %cst_40 {dimension_numbers = #tpu.dot_dimension_numbers<[1], [0], [0], [1], [0, 0, 1, 1], [], []>} : vector<8x8xf32>, vector<8x8xf32>, vector<8x8xf32> -> vector<8x8xf32>
    %c0_41 = arith.constant 0 : index
    %c0_42 = arith.constant 0 : index
    %51 = vector.load %arg8[%c0_41, %c0_42] : memref<1x8xf32, #tpu.memory_space<vmem>>, vector<1x8xf32>
    %52 = vector.broadcast %51 : vector<1x8xf32> to vector<8x8xf32>
    %53 = arith.addf %50, %52 : vector<8x8xf32>
    %cst_43 = arith.constant 0.000000e+00 : f32
    %54 = vector.broadcast %cst_43 : f32 to vector<8x8xf32>
    %55 = arith.maximumf %53, %54 : vector<8x8xf32>
    %c0_44 = arith.constant 0 : index
    %c0_45 = arith.constant 0 : index
    %56 = vector.load %arg10[%c0_44, %c0_45] : memref<8x128xf32, #tpu.memory_space<vmem>>, vector<8x128xf32>
    %cst_46 = arith.constant dense<0.000000e+00> : vector<8x128xf32>
    %57 = tpu.matmul %55, %56, %cst_46 {dimension_numbers = #tpu.dot_dimension_numbers<[1], [0], [0], [1], [0, 0, 1, 1], [], []>} : vector<8x8xf32>, vector<8x128xf32>, vector<8x128xf32> -> vector<8x128xf32>
    %c0_47 = arith.constant 0 : index
    %c0_48 = arith.constant 0 : index
    %58 = vector.load %arg11[%c0_47, %c0_48] : memref<1x128xf32, #tpu.memory_space<vmem>>, vector<1x128xf32>
    %59 = vector.broadcast %58 : vector<1x128xf32> to vector<8x128xf32>
    %60 = arith.addf %57, %59 : vector<8x128xf32>
    %c0_49 = arith.constant 0 : index
    %c0_50 = arith.constant 0 : index
    %61 = vector.load %arg16[%c0_49, %c0_50] : memref<8x1280xf32, #tpu.memory_space<vmem>>, vector<8x1280xf32>
    %c0_51 = arith.constant 0 : index
    %c0_52 = arith.constant 0 : index
    %62 = vector.load %arg9[%c0_51, %c0_52] : memref<1280x128xf32, #tpu.memory_space<vmem>>, vector<1280x128xf32>
    %cst_53 = arith.constant dense<0.000000e+00> : vector<8x128xf32>
    %63 = tpu.matmul %61, %62, %cst_53 {dimension_numbers = #tpu.dot_dimension_numbers<[1], [0], [0], [1], [0, 0, 1, 1], [], []>} : vector<8x1280xf32>, vector<1280x128xf32>, vector<8x128xf32> -> vector<8x128xf32>
    %64 = arith.addf %60, %63 : vector<8x128xf32>
    %cst_54 = arith.constant 0.000000e+00 : f32
    %65 = vector.broadcast %cst_54 : f32 to vector<8x128xf32>
    %66 = arith.maximumf %64, %65 : vector<8x128xf32>
    %c0_55 = arith.constant 0 : index
    %c0_56 = arith.constant 0 : index
    %67 = vector.load %arg12[%c0_55, %c0_56] : memref<128x4xf32, #tpu.memory_space<vmem>>, vector<128x4xf32>
    %cst_57 = arith.constant dense<0.000000e+00> : vector<8x4xf32>
    %68 = tpu.matmul %66, %67, %cst_57 {dimension_numbers = #tpu.dot_dimension_numbers<[1], [0], [0], [1], [0, 0, 1, 1], [], []>} : vector<8x128xf32>, vector<128x4xf32>, vector<8x4xf32> -> vector<8x4xf32>
    %c0_58 = arith.constant 0 : index
    %c0_59 = arith.constant 0 : index
    %69 = vector.load %arg13[%c0_58, %c0_59] : memref<1x4xf32, #tpu.memory_space<vmem>>, vector<1x4xf32>
    %70 = vector.broadcast %69 : vector<1x4xf32> to vector<8x4xf32>
    %71 = arith.addf %68, %70 : vector<8x4xf32>
    %c0_60 = arith.constant 0 : index
    %c0_61 = arith.constant 0 : index
    %72 = vector.load %arg14[%c0_60, %c0_61] : memref<8x4xf32, #tpu.memory_space<vmem>>, vector<8x4xf32>
    tpu.vector_store %arg14[%c0_60, %c0_61], %71 {strides = array<i32>} : memref<8x4xf32, #tpu.memory_space<vmem>>, vector<8x4xf32>,
    return
  }
  func.func @transform_0(%arg0: i32) -> (i32, i32) {
    %c0_i32 = arith.constant 0 : i32
    %c0_i32_0 = arith.constant 0 : i32
    return %arg0, %c0_i32 : i32, i32
  }
  func.func @transform_1(%arg0: i32) -> (i32, i32) {
    %c0_i32 = arith.constant 0 : i32
    %c0_i32_0 = arith.constant 0 : i32
    return %arg0, %c0_i32 : i32, i32
  }
  func.func @transform_2(%arg0: i32) -> (i32, i32) {
    %c0_i32 = arith.constant 0 : i32
    %c0_i32_0 = arith.constant 0 : i32
    %c0_i32_1 = arith.constant 0 : i32
    return %c0_i32, %c0_i32_0 : i32, i32
  }
  func.func @transform_3(%arg0: i32) -> (i32, i32) {
    %c0_i32 = arith.constant 0 : i32
    %c0_i32_0 = arith.constant 0 : i32
    %c0_i32_1 = arith.constant 0 : i32
    return %c0_i32, %c0_i32_0 : i32, i32
  }
  func.func @transform_4(%arg0: i32) -> (i32, i32, i32) {
    %c0_i32 = arith.constant 0 : i32
    %c0_i32_0 = arith.constant 0 : i32
    %c0_i32_1 = arith.constant 0 : i32
    %c0_i32_2 = arith.constant 0 : i32
    return %c0_i32, %c0_i32_0, %c0_i32_1 : i32, i32, i32
  }
  func.func @transform_5(%arg0: i32) -> (i32, i32) {
    %c0_i32 = arith.constant 0 : i32
    %c0_i32_0 = arith.constant 0 : i32
    %c0_i32_1 = arith.constant 0 : i32
    return %c0_i32, %c0_i32_0 : i32, i32
  }
  func.func @transform_6(%arg0: i32) -> (i32, i32) {
    %c0_i32 = arith.constant 0 : i32
    %c0_i32_0 = arith.constant 0 : i32
    %c0_i32_1 = arith.constant 0 : i32
    return %c0_i32, %c0_i32_0 : i32, i32
  }
  func.func @transform_7(%arg0: i32) -> (i32, i32) {
    %c0_i32 = arith.constant 0 : i32
    %c0_i32_0 = arith.constant 0 : i32
    %c0_i32_1 = arith.constant 0 : i32
    return %c0_i32, %c0_i32_0 : i32, i32
  }
  func.func @transform_8(%arg0: i32) -> (i32, i32) {
    %c0_i32 = arith.constant 0 : i32
    %c0_i32_0 = arith.constant 0 : i32
    %c0_i32_1 = arith.constant 0 : i32
    return %c0_i32, %c0_i32_0 : i32, i32
  }
  func.func @transform_9(%arg0: i32) -> (i32, i32) {
    %c0_i32 = arith.constant 0 : i32
    %c0_i32_0 = arith.constant 0 : i32
    %c0_i32_1 = arith.constant 0 : i32
    return %c0_i32, %c0_i32_0 : i32, i32
  }
  func.func @transform_10(%arg0: i32) -> (i32, i32) {
    %c0_i32 = arith.constant 0 : i32
    %c0_i32_0 = arith.constant 0 : i32
    %c0_i32_1 = arith.constant 0 : i32
    return %c0_i32, %c0_i32_0 : i32, i32
  }
  func.func @transform_11(%arg0: i32) -> (i32, i32) {
    %c0_i32 = arith.constant 0 : i32
    %c0_i32_0 = arith.constant 0 : i32
    %c0_i32_1 = arith.constant 0 : i32
    return %c0_i32, %c0_i32_0 : i32, i32
  }
  func.func @transform_12(%arg0: i32) -> (i32, i32) {
    %c0_i32 = arith.constant 0 : i32
    %c0_i32_0 = arith.constant 0 : i32
    %c0_i32_1 = arith.constant 0 : i32
    return %c0_i32, %c0_i32_0 : i32, i32
  }
  func.func @transform_13(%arg0: i32) -> (i32, i32) {
    %c0_i32 = arith.constant 0 : i32
    %c0_i32_0 = arith.constant 0 : i32
    return %arg0, %c0_i32 : i32, i32
  }
}

</mosaic_0001>

<llo_original>
// kernel: qnetwork_forward.1
$region0: #{qnetwork_forward.1}
  #allocation0 [shape = 'u32[]', space=smem, size = 0x4, offset = 0x4, fixed_abs, tag = 'smem constant byte address 0x4 - core index']
  #allocation1 [shape = 'u32[144,128]{1,0:T(1,128)}', space=vmem, size = 0x12000, scoped, tag = 'internal scratch']
  #allocation2 [shape = 'f32[96,256]{1,0:T(8,128)}', space=vmem, size = 0x18000, scoped, tag = 'scratch operand']
  #allocation3 [shape = 'f32[8,1280]{1,0:T(8,128)}', space=vmem, size = 0xa000, scoped, tag = 'scratch operand']
  %s0 = inlined_call_operand.vmem [shape: f32[96,320], index: 0, kind: input, shape index: {}]
  %s1 = inlined_call_operand.vmem [shape: f32[8,8], index: 1, kind: input, shape index: {}]
  %s2 = inlined_call_operand.vmem [shape: f32[320,256], index: 2, kind: input, shape index: {}]
  %s3 = inlined_call_operand.vmem [shape: f32[1,256], index: 3, kind: input, shape index: {}]
  %s4 = inlined_call_operand.vmem [shape: f32[3,256,128], index: 4, kind: input, shape index: {}]
  %s5 = inlined_call_operand.vmem [shape: f32[1,128], index: 5, kind: input, shape index: {}]
  %s6 = inlined_call_operand.vmem [shape: f32[8,8], index: 6, kind: input, shape index: {}]
  %s7 = inlined_call_operand.vmem [shape: f32[1,8], index: 7, kind: input, shape index: {}]
  %s8 = inlined_call_operand.vmem [shape: f32[1280,128], index: 8, kind: input, shape index: {}]
  %s9 = inlined_call_operand.vmem [shape: f32[8,128], index: 9, kind: input, shape index: {}]
  %s10 = inlined_call_operand.vmem [shape: f32[1,128], index: 10, kind: input, shape index: {}]
  %s11 = inlined_call_operand.vmem [shape: f32[128,4], index: 11, kind: input, shape index: {}]
  %s12 = inlined_call_operand.vmem [shape: f32[1,4], index: 12, kind: input, shape index: {}]
  %s13 = inlined_call_operand.vmem [shape: f32[8,4], index: 13, kind: output, shape index: {}]
  %s14 = sld [smem:[#allocation0]]
  $region62: #{qnetwork_forward.1} parent=0
    _
  %s16 = ssub.s32 1, %s14
  %s17 = scalar_select 0, %s16, %s14
  // Predicated region
  $region2: #{qnetwork_forward.1} parent=0 // pred_check
    _
  $region3: #{qnetwork_forward.1} parent=0 // pred_check_branch
    %19 = sbr.rel (0) target = $region5
  $region4: #{qnetwork_forward.1} parent=0 // pred_region
    _
  $region5: #{qnetwork_forward.1} parent=0 // pred_fallthru
    _
  // Predicated region
  $region6: #{qnetwork_forward.1} parent=0 // pred_check
    _
  $region7: #{qnetwork_forward.1} parent=0 // pred_check_branch
    %21 = sbr.rel (0) target = $region9
  $region8: #{qnetwork_forward.1} parent=0 // pred_region
    _
  $region9: #{qnetwork_forward.1} parent=0 // pred_fallthru
    _
  // Predicated region
  $region10: #{qnetwork_forward.1} parent=0 // pred_check
    _
  $region11: #{qnetwork_forward.1} parent=0 // pred_check_branch
    %23 = sbr.rel (0) target = $region13
  $region12: #{qnetwork_forward.1} parent=0 // pred_region
    _
  $region13: #{qnetwork_forward.1} parent=0 // pred_fallthru
    _
  // Predicated region
  $region14: #{qnetwork_forward.1} parent=0 // pred_check
    _
  $region15: #{qnetwork_forward.1} parent=0 // pred_check_branch
    %25 = sbr.rel (0) target = $region17
  $region16: #{qnetwork_forward.1} parent=0 // pred_region
    _
  $region17: #{qnetwork_forward.1} parent=0 // pred_fallthru
    _
  // Predicated region
  $region18: #{qnetwork_forward.1} parent=0 // pred_check
    _
  $region19: #{qnetwork_forward.1} parent=0 // pred_check_branch
    %27 = sbr.rel (0) target = $region21
  $region20: #{qnetwork_forward.1} parent=0 // pred_region
    _
  $region21: #{qnetwork_forward.1} parent=0 // pred_fallthru
    _
  // Predicated region
  $region22: #{qnetwork_forward.1} parent=0 // pred_check
    _
  $region23: #{qnetwork_forward.1} parent=0 // pred_check_branch
    %29 = sbr.rel (0) target = $region25
  $region24: #{qnetwork_forward.1} parent=0 // pred_region
    _
  $region25: #{qnetwork_forward.1} parent=0 // pred_fallthru
    _
  // Predicated region
  $region26: #{qnetwork_forward.1} parent=0 // pred_check
    _
  $region27: #{qnetwork_forward.1} parent=0 // pred_check_branch
    %31 = sbr.rel (0) target = $region29
  $region28: #{qnetwork_forward.1} parent=0 // pred_region
    _
  $region29: #{qnetwork_forward.1} parent=0 // pred_fallthru
    _
  // Predicated region
  $region30: #{qnetwork_forward.1} parent=0 // pred_check
    _
  $region31: #{qnetwork_forward.1} parent=0 // pred_check_branch
    %33 = sbr.rel (0) target = $region33
  $region32: #{qnetwork_forward.1} parent=0 // pred_region
    _
  $region33: #{qnetwork_forward.1} parent=0 // pred_fallthru
    _
  // Predicated region
  $region34: #{qnetwork_forward.1} parent=0 // pred_check
    _
  $region35: #{qnetwork_forward.1} parent=0 // pred_check_branch
    %35 = sbr.rel (0) target = $region37
  $region36: #{qnetwork_forward.1} parent=0 // pred_region
    _
  $region37: #{qnetwork_forward.1} parent=0 // pred_fallthru
    _
  // Predicated region
  $region38: #{qnetwork_forward.1} parent=0 // pred_check
    _
  $region39: #{qnetwork_forward.1} parent=0 // pred_check_branch
    %37 = sbr.rel (0) target = $region41
  $region40: #{qnetwork_forward.1} parent=0 // pred_region
    _
  $region41: #{qnetwork_forward.1} parent=0 // pred_fallthru
    _
  // Predicated region
  $region42: #{qnetwork_forward.1} parent=0 // pred_check
    _
  $region43: #{qnetwork_forward.1} parent=0 // pred_check_branch
    %39 = sbr.rel (0) target = $region45
  $region44: #{qnetwork_forward.1} parent=0 // pred_region
    _
  $region45: #{qnetwork_forward.1} parent=0 // pred_fallthru
    _
  // Predicated region
  $region46: #{qnetwork_forward.1} parent=0 // pred_check
    _
  $region47: #{qnetwork_forward.1} parent=0 // pred_check_branch
    %41 = sbr.rel (0) target = $region49
  $region48: #{qnetwork_forward.1} parent=0 // pred_region
    _
  $region49: #{qnetwork_forward.1} parent=0 // pred_fallthru
    _
  // Predicated region
  $region50: #{qnetwork_forward.1} parent=0 // pred_check
    _
  $region51: #{qnetwork_forward.1} parent=0 // pred_check_branch
    %43 = sbr.rel (0) target = $region53
  $region52: #{qnetwork_forward.1} parent=0 // pred_region
    _
  $region53: #{qnetwork_forward.1} parent=0 // pred_fallthru
    _
  %v44 = vld [vmem:[%s0] sm:$0xff]
  %v45 = vld [vmem:[%s0 + $0x8] sm:$0xff]
  %v46 = vld [vmem:[%s0 + $0x10] sm:$0xff]
  %v47 = vld [vmem:[%s0 + $0x18] sm:$0xff]
  %v48 = vld [vmem:[%s0 + $0x20] sm:$0xff]
  %v49 = vld [vmem:[%s0 + $0x28] sm:$0xff]
  %v50 = vld [vmem:[%s0 + $0x30] sm:$0xff]
  %v51 = vld [vmem:[%s0 + $0x38] sm:$0xff]
  %v52 = vld [vmem:[%s0 + $0x40] sm:$0xff]
  %v53 = vld [vmem:[%s0 + $0x48] sm:$0xff]
  %v54 = vld [vmem:[%s0 + $0x50] sm:$0xff]
  %v55 = vld [vmem:[%s0 + $0x58] sm:$0xff]
  %v56 = vld [vmem:[%s0 + $0x60] sm:$0xff]
  %v57 = vld [vmem:[%s0 + $0x68] sm:$0xff]
  %v58 = vld [vmem:[%s0 + $0x70] sm:$0xff]
  %v59 = vld [vmem:[%s0 + $0x78] sm:$0xff]
  %v60 = vld [vmem:[%s0 + $0x80] sm:$0xff]
  %v61 = vld [vmem:[%s0 + $0x88] sm:$0xff]
  %v62 = vld [vmem:[%s0 + $0x90] sm:$0xff]
  %v63 = vld [vmem:[%s0 + $0x98] sm:$0xff]
  %v64 = vld [vmem:[%s0 + $0xa0] sm:$0xff]
  %v65 = vld [vmem:[%s0 + $0xa8] sm:$0xff]
  %v66 = vld [vmem:[%s0 + $0xb0] sm:$0xff]
  %v67 = vld [vmem:[%s0 + $0xb8] sm:$0xff]
  %v68 = vld [vmem:[%s0 + $0xc0] sm:$0xff]
  %v69 = vld [vmem:[%s0 + $0xc8] sm:$0xff]
  %v70 = vld [vmem:[%s0 + $0xd0] sm:$0xff]
  %v71 = vld [vmem:[%s0 + $0xd8] sm:$0xff]
  %v72 = vld [vmem:[%s0 + $0xe0] sm:$0xff]
  %v73 = vld [vmem:[%s0 + $0xe8] sm:$0xff]
  %v74 = vld [vmem:[%s0 + $0xf0] sm:$0xff]
  %v75 = vld [vmem:[%s0 + $0xf8] sm:$0xff]
  %v76 = vld [vmem:[%s0 + $0x100] sm:$0xff]
  %v77 = vld [vmem:[%s0 + $0x108] sm:$0xff]
  %v78 = vld [vmem:[%s0 + $0x110] sm:$0xff]
  %v79 = vld [vmem:[%s0 + $0x118] sm:$0xff]
  %v80 = vld [vmem:[%s2] sm:$0xff]
  %v81 = vld [vmem:[%s2 + $0x8] sm:$0xff]
  %v82 = vld [vmem:[%s2 + $0x10] sm:$0xff]
  %v83 = vld [vmem:[%s2 + $0x18] sm:$0xff]
  %v84 = vld [vmem:[%s2 + $0x20] sm:$0xff]
  %v85 = vld [vmem:[%s2 + $0x28] sm:$0xff]
  %v86 = vld [vmem:[%s2 + $0x30] sm:$0xff]
  %v87 = vld [vmem:[%s2 + $0x38] sm:$0xff]
  %v88 = vld [vmem:[%s2 + $0x40] sm:$0xff]
  %v89 = vld [vmem:[%s2 + $0x48] sm:$0xff]
  %v90 = vld [vmem:[%s2 + $0x50] sm:$0xff]
  %v91 = vld [vmem:[%s2 + $0x58] sm:$0xff]
  %v92 = vld [vmem:[%s2 + $0x60] sm:$0xff]
  %v93 = vld [vmem:[%s2 + $0x68] sm:$0xff]
  %v94 = vld [vmem:[%s2 + $0x70] sm:$0xff]
  %v95 = vld [vmem:[%s2 + $0x78] sm:$0xff]
  %v96 = vld [vmem:[%s2 + $0x80] sm:$0xff]
  %v97 = vld [vmem:[%s2 + $0x88] sm:$0xff]
  %v98 = vld [vmem:[%s2 + $0x90] sm:$0xff]
  %v99 = vld [vmem:[%s2 + $0x98] sm:$0xff]
  %v100 = vld [vmem:[%s2 + $0xa0] sm:$0xff]
  %v101 = vld [vmem:[%s2 + $0xa8] sm:$0xff]
  %v102 = vld [vmem:[%s2 + $0xb0] sm:$0xff]
  %v103 = vld [vmem:[%s2 + $0xb8] sm:$0xff]
  %v104 = vld [vmem:[%s2 + $0xc0] sm:$0xff]
  %v105 = vld [vmem:[%s2 + $0xc8] sm:$0xff]
  %v106 = vld [vmem:[%s2 + $0xd0] sm:$0xff]
  %v107 = vld [vmem:[%s2 + $0xd8] sm:$0xff]
  %v108 = vld [vmem:[%s2 + $0xe0] sm:$0xff]
  %v109 = vld [vmem:[%s2 + $0xe8] sm:$0xff]
  %v110 = vld [vmem:[%s2 + $0xf0] sm:$0xff]
  %v111 = vld [vmem:[%s2 + $0xf8] sm:$0xff]
  %v112 = vld [vmem:[%s2 + $0x100] sm:$0xff]
  %v113 = vld [vmem:[%s2 + $0x108] sm:$0xff]
  %v114 = vld [vmem:[%s2 + $0x110] sm:$0xff]
  %v115 = vld [vmem:[%s2 + $0x118] sm:$0xff]
  %v116 = vld [vmem:[%s2 + $0x120] sm:$0xff]
  %v117 = vld [vmem:[%s2 + $0x128] sm:$0xff]
  %v118 = vld [vmem:[%s2 + $0x130] sm:$0xff]
  %v119 = vld [vmem:[%s2 + $0x138] sm:$0xff]
  %v120 = vld [vmem:[%s2 + $0x140] sm:$0xff]
  %v121 = vld [vmem:[%s2 + $0x148] sm:$0xff]
  %v122 = vld [vmem:[%s2 + $0x150] sm:$0xff]
  %v123 = vld [vmem:[%s2 + $0x158] sm:$0xff]
  %v124 = vld [vmem:[%s2 + $0x160] sm:$0xff]
  %v125 = vld [vmem:[%s2 + $0x168] sm:$0xff]
  %v126 = vld [vmem:[%s2 + $0x170] sm:$0xff]
  %v127 = vld [vmem:[%s2 + $0x178] sm:$0xff]
  %v128 = vld [vmem:[%s2 + $0x180] sm:$0xff]
  %v129 = vld [vmem:[%s2 + $0x188] sm:$0xff]
  %v130 = vld [vmem:[%s2 + $0x190] sm:$0xff]
  %v131 = vld [vmem:[%s2 + $0x198] sm:$0xff]
  %v132 = vld [vmem:[%s2 + $0x1a0] sm:$0xff]
  %v133 = vld [vmem:[%s2 + $0x1a8] sm:$0xff]
  %v134 = vld [vmem:[%s2 + $0x1b0] sm:$0xff]
  %v135 = vld [vmem:[%s2 + $0x1b8] sm:$0xff]
  %v136 = vld [vmem:[%s2 + $0x1c0] sm:$0xff]
  %v137 = vld [vmem:[%s2 + $0x1c8] sm:$0xff]
  %v138 = vld [vmem:[%s2 + $0x1d0] sm:$0xff]
  %v139 = vld [vmem:[%s2 + $0x1d8] sm:$0xff]
  %v140 = vld [vmem:[%s2 + $0x1e0] sm:$0xff]
  %v141 = vld [vmem:[%s2 + $0x1e8] sm:$0xff]
  %v142 = vld [vmem:[%s2 + $0x1f0] sm:$0xff]
  %v143 = vld [vmem:[%s2 + $0x1f8] sm:$0xff]
  %v144 = vld [vmem:[%s2 + $0x200] sm:$0xff]
  %v145 = vld [vmem:[%s2 + $0x208] sm:$0xff]
  %v146 = vld [vmem:[%s2 + $0x210] sm:$0xff]
  %v147 = vld [vmem:[%s2 + $0x218] sm:$0xff]
  %v148 = vld [vmem:[%s2 + $0x220] sm:$0xff]
  %v149 = vld [vmem:[%s2 + $0x228] sm:$0xff]
  %v150 = vld [vmem:[%s2 + $0x230] sm:$0xff]
  %v151 = vld [vmem:[%s2 + $0x238] sm:$0xff]
  %v152 = vld [vmem:[%s2 + $0x240] sm:$0xff]
  %v153 = vld [vmem:[%s2 + $0x248] sm:$0xff]
  %v154 = vld [vmem:[%s2 + $0x250] sm:$0xff]
  %v155 = vld [vmem:[%s2 + $0x258] sm:$0xff]
  %v156 = vld [vmem:[%s2 + $0x260] sm:$0xff]
  %v157 = vld [vmem:[%s2 + $0x268] sm:$0xff]
  %v158 = vld [vmem:[%s2 + $0x270] sm:$0xff]
  %v159 = vld [vmem:[%s2 + $0x278] sm:$0xff]
  %v160 = vld [vmem:[%s3] sm:$0x3]
  %v162 = vlaneseq
  %v163 = vshrl.u32 %v162, 7
  %v164 = vsub.s32 0, %v163
  %v165 = vrot.slane %v160, %v164
  %v166 = vlaneseq
  %v167 = vshrl.u32 %v166, 7
  %v168 = vsub.s32 1, %v167
  %v169 = vrot.slane %v160, %v168
  %vm172 = vcmask 523264
  %v174 = vsel %vm172, %v46, 0
  %v177 = vsel %vm172, %v49, 0
  %v180 = vsel %vm172, %v52, 0
  %v183 = vsel %vm172, %v55, 0
  %v186 = vsel %vm172, %v58, 0
  %v189 = vsel %vm172, %v61, 0
  %v192 = vsel %vm172, %v64, 0
  %v195 = vsel %vm172, %v67, 0
  %v198 = vsel %vm172, %v70, 0
  %v201 = vsel %vm172, %v73, 0
  %v204 = vsel %vm172, %v76, 0
  %v207 = vsel %vm172, %v79, 0
  %209 = vmatprep.subr.mxu0 %v111
  %210 = vmatpush1.msra.mxu0 %v110
  %211 = vmatprep.subr.mxu0 %v109
  %212 = vmatpush1.msra.mxu0 %v108
  %213 = vmatprep.subr.mxu0 %v107
  %214 = vmatpush1.msra.mxu0 %v106
  %215 = vmatprep.subr.mxu0 %v105
  %216 = vmatpush1.msra.mxu0 %v104
  %217 = vmatprep.subr.mxu0 %v103
  %218 = vmatpush1.msra.mxu0 %v102
  %219 = vmatprep.subr.mxu0 %v101
  %220 = vmatpush1.msra.mxu0 %v100
  %221 = vmatprep.subr.mxu0 %v99
  %222 = vmatpush1.msra.mxu0 %v98
  %223 = vmatprep.subr.mxu0 %v97
  %224 = vmatpush1.msra.mxu0 %v96
  %225 = vmatprep.subr.mxu0 %v95
  %226 = vmatpush1.msra.mxu0 %v94
  %227 = vmatprep.subr.mxu0 %v93
  %228 = vmatpush1.msra.mxu0 %v92
  %229 = vmatprep.subr.mxu0 %v91
  %230 = vmatpush1.msra.mxu0 %v90
  %231 = vmatprep.subr.mxu0 %v89
  %232 = vmatpush1.msra.mxu0 %v88
  %233 = vmatprep.subr.mxu0 %v87
  %234 = vmatpush1.msra.mxu0 %v86
  %235 = vmatprep.subr.mxu0 %v85
  %236 = vmatpush1.msra.mxu0 %v84
  %237 = vmatprep.subr.mxu0 %v83
  %238 = vmatpush1.msra.mxu0 %v82
  %239 = vmatprep.subr.mxu0 %v81
  %240 = vmatpush1.msra.mxu0 %v80
  %241 = vmatprep.subr.mxu0 %v143
  %242 = vmatpush2.msra.mxu0 %v142
  %243 = vmatprep.subr.mxu0 %v141
  %244 = vmatpush2.msra.mxu0 %v140
  %245 = vmatprep.subr.mxu0 %v139
  %246 = vmatpush2.msra.mxu0 %v138
  %247 = vmatprep.subr.mxu0 %v137
  %248 = vmatpush2.msra.mxu0 %v136
  %249 = vmatprep.subr.mxu0 %v135
  %250 = vmatpush2.msra.mxu0 %v134
  %251 = vmatprep.subr.mxu0 %v133
  %252 = vmatpush2.msra.mxu0 %v132
  %253 = vmatprep.subr.mxu0 %v131
  %254 = vmatpush2.msra.mxu0 %v130
  %255 = vmatprep.subr.mxu0 %v129
  %256 = vmatpush2.msra.mxu0 %v128
  %257 = vmatprep.subr.mxu0 %v127
  %258 = vmatpush2.msra.mxu0 %v126
  %259 = vmatprep.subr.mxu0 %v125
  %260 = vmatpush2.msra.mxu0 %v124
  %261 = vmatprep.subr.mxu0 %v123
  %262 = vmatpush2.msra.mxu0 %v122
  %263 = vmatprep.subr.mxu0 %v121
  %264 = vmatpush2.msra.mxu0 %v120
  %265 = vmatprep.subr.mxu0 %v119
  %266 = vmatpush2.msra.mxu0 %v118
  %267 = vmatprep.subr.mxu0 %v117
  %268 = vmatpush2.msra.mxu0 %v116
  %269 = vmatprep.subr.mxu0 %v115
  %270 = vmatpush2.msra.mxu0 %v114
  %271 = vmatprep.subr.mxu0 %v113
  %272 = vmatpush2.msra.mxu0 %v112
  %273 = vmatprep.mubr.f32.mxu0 %v45
  %274 = vmatmul.mubr.f32.gmra.mxu0 %v44
  %v275 = vpop.f32.mrf.mxu0
  %v276 = vadd.f32 %v165, %v275
  %v277 = vpop.f32.mrf.mxu0
  %v278 = vadd.f32 %v169, %v277
  %279 = vmatprep.mubr.f32.mxu0 %v48
  %280 = vmatmul.mubr.f32.gmra.mxu0 %v47
  %v281 = vpop.f32.mrf.mxu0
  %v282 = vadd.f32 %v165, %v281
  %v283 = vpop.f32.mrf.mxu0
  %v284 = vadd.f32 %v169, %v283
  %285 = vmatprep.mubr.f32.mxu0 %v51
  %286 = vmatmul.mubr.f32.gmra.mxu0 %v50
  %v287 = vpop.f32.mrf.mxu0
  %v288 = vadd.f32 %v165, %v287
  %v289 = vpop.f32.mrf.mxu0
  %v290 = vadd.f32 %v169, %v289
  %291 = vmatprep.mubr.f32.mxu0 %v54
  %292 = vmatmul.mubr.f32.gmra.mxu0 %v53
  %v293 = vpop.f32.mrf.mxu0
  %v294 = vadd.f32 %v165, %v293
  %v295 = vpop.f32.mrf.mxu0
  %v296 = vadd.f32 %v169, %v295
  %297 = vmatprep.mubr.f32.mxu0 %v57
  %298 = vmatmul.mubr.f32.gmra.mxu0 %v56
  %v299 = vpop.f32.mrf.mxu0
  %v300 = vadd.f32 %v165, %v299
  %v301 = vpop.f32.mrf.mxu0
  %v302 = vadd.f32 %v169, %v301
  %303 = vmatprep.mubr.f32.mxu0 %v60
  %304 = vmatmul.mubr.f32.gmra.mxu0 %v59
  %v305 = vpop.f32.mrf.mxu0
  %v306 = vadd.f32 %v165, %v305
  %v307 = vpop.f32.mrf.mxu0
  %v308 = vadd.f32 %v169, %v307
  %309 = vmatprep.mubr.f32.mxu0 %v63
  %310 = vmatmul.mubr.f32.gmra.mxu0 %v62
  %v311 = vpop.f32.mrf.mxu0
  %v312 = vadd.f32 %v165, %v311
  %v313 = vpop.f32.mrf.mxu0
  %v314 = vadd.f32 %v169, %v313
  %315 = vmatprep.mubr.f32.mxu0 %v66
  %316 = vmatmul.mubr.f32.gmra.mxu0 %v65
  %v317 = vpop.f32.mrf.mxu0
  %v318 = vadd.f32 %v165, %v317
  %v319 = vpop.f32.mrf.mxu0
  %v320 = vadd.f32 %v169, %v319
  %321 = vmatprep.mubr.f32.mxu0 %v69
  %322 = vmatmul.mubr.f32.gmra.mxu0 %v68
  %v323 = vpop.f32.mrf.mxu0
  %v324 = vadd.f32 %v165, %v323
  %v325 = vpop.f32.mrf.mxu0
  %v326 = vadd.f32 %v169, %v325
  %327 = vmatprep.mubr.f32.mxu0 %v72
  %328 = vmatmul.mubr.f32.gmra.mxu0 %v71
  %v329 = vpop.f32.mrf.mxu0
  %v330 = vadd.f32 %v165, %v329
  %v331 = vpop.f32.mrf.mxu0
  %v332 = vadd.f32 %v169, %v331
  %333 = vmatprep.mubr.f32.mxu0 %v75
  %334 = vmatmul.mubr.f32.gmra.mxu0 %v74
  %v335 = vpop.f32.mrf.mxu0
  %v336 = vadd.f32 %v165, %v335
  %v337 = vpop.f32.mrf.mxu0
  %v338 = vadd.f32 %v169, %v337
  %339 = vmatprep.mubr.f32.mxu0 %v78
  %340 = vmatmul.mubr.f32.gmra.mxu0 %v77
  %v341 = vpop.f32.mrf.mxu0
  %v342 = vadd.f32 %v165, %v341
  %v343 = vpop.f32.mrf.mxu0
  %v344 = vadd.f32 %v169, %v343
  %345 = vdwg.mxu0
  %346 = vmatprep.subr.mxu0 0.0
  %347 = vmatpush1.msra.mxu0 0.0
  %348 = vmatprep.subr.mxu0 0.0
  %349 = vmatpush1.msra.mxu0 0.0
  %350 = vmatprep.subr.mxu0 0.0
  %351 = vmatpush1.msra.mxu0 0.0
  %352 = vmatprep.subr.mxu0 0.0
  %353 = vmatpush1.msra.mxu0 0.0
  %354 = vmatprep.subr.mxu0 0.0
  %355 = vmatpush1.msra.mxu0 0.0
  %356 = vmatprep.subr.mxu0 0.0
  %357 = vmatpush1.msra.mxu0 0.0
  %358 = vmatprep.subr.mxu0 0.0
  %359 = vmatpush1.msra.mxu0 0.0
  %360 = vmatprep.subr.mxu0 0.0
  %361 = vmatpush1.msra.mxu0 0.0
  %362 = vmatprep.subr.mxu0 %v159
  %363 = vmatpush1.msra.mxu0 %v158
  %364 = vmatprep.subr.mxu0 %v157
  %365 = vmatpush1.msra.mxu0 %v156
  %366 = vmatprep.subr.mxu0 %v155
  %367 = vmatpush1.msra.mxu0 %v154
  %368 = vmatprep.subr.mxu0 %v153
  %369 = vmatpush1.msra.mxu0 %v152
  %370 = vmatprep.subr.mxu0 %v151
  %371 = vmatpush1.msra.mxu0 %v150
  %372 = vmatprep.subr.mxu0 %v149
  %373 = vmatpush1.msra.mxu0 %v148
  %374 = vmatprep.subr.mxu0 %v147
  %375 = vmatpush1.msra.mxu0 %v146
  %376 = vmatprep.subr.mxu0 %v145
  %377 = vmatpush1.msra.mxu0 %v144
  %378 = vmatprep.subr.mxu0 0.0
  %379 = vmatpush2.msra.mxu0 0.0
  %380 = vmatprep.subr.mxu0 0.0
  %381 = vmatpush2.msra.mxu0 0.0
  %382 = vmatprep.subr.mxu0 0.0
  %383 = vmatpush2.msra.mxu0 0.0
  %384 = vmatprep.subr.mxu0 0.0
  %385 = vmatpush2.msra.mxu0 0.0
  %386 = vmatprep.subr.mxu0 0.0
  %387 = vmatpush2.msra.mxu0 0.0
  %388 = vmatprep.subr.mxu0 0.0
  %389 = vmatpush2.msra.mxu0 0.0
  %390 = vmatprep.subr.mxu0 0.0
  %391 = vmatpush2.msra.mxu0 0.0
  %392 = vmatprep.subr.mxu0 0.0
  %393 = vmatpush2.msra.mxu0 0.0
  %394 = vmatprep.subr.mxu0 0.0
  %395 = vmatpush2.msra.mxu0 0.0
  %396 = vmatprep.subr.mxu0 0.0
  %397 = vmatpush2.msra.mxu0 0.0
  %398 = vmatprep.subr.mxu0 0.0
  %399 = vmatpush2.msra.mxu0 0.0
  %400 = vmatprep.subr.mxu0 0.0
  %401 = vmatpush2.msra.mxu0 0.0
  %402 = vmatprep.subr.mxu0 0.0
  %403 = vmatpush2.msra.mxu0 0.0
  %404 = vmatprep.subr.mxu0 0.0
  %405 = vmatpush2.msra.mxu0 0.0
  %406 = vmatprep.subr.mxu0 0.0
  %407 = vmatpush2.msra.mxu0 0.0
  %408 = vmatprep.subr.mxu0 0.0
  %409 = vmatpush2.msra.mxu0 0.0
  %410 = vmatprep.mubr.f32.mxu0 0.0
  %411 = vmatmul.mubr.f32.gmra.mxu0 %v174
  %v412 = vpop.f32.mrf.mxu0
  %v413 = vadd.f32 %v276, %v412
  %v414 = vpop.f32.mrf.mxu0
  %v415 = vadd.f32 %v278, %v414
  %416 = vmatprep.mubr.f32.mxu0 0.0
  %417 = vmatmul.mubr.f32.gmra.mxu0 %v177
  %v418 = vpop.f32.mrf.mxu0
  %v419 = vadd.f32 %v282, %v418
  %v420 = vpop.f32.mrf.mxu0
  %v421 = vadd.f32 %v284, %v420
  %422 = vmatprep.mubr.f32.mxu0 0.0
  %423 = vmatmul.mubr.f32.gmra.mxu0 %v180
  %v424 = vpop.f32.mrf.mxu0
  %v425 = vadd.f32 %v288, %v424
  %v426 = vpop.f32.mrf.mxu0
  %v427 = vadd.f32 %v290, %v426
  %428 = vmatprep.mubr.f32.mxu0 0.0
  %429 = vmatmul.mubr.f32.gmra.mxu0 %v183
  %v430 = vpop.f32.mrf.mxu0
  %v431 = vadd.f32 %v294, %v430
  %v432 = vpop.f32.mrf.mxu0
  %v433 = vadd.f32 %v296, %v432
  %434 = vmatprep.mubr.f32.mxu0 0.0
  %435 = vmatmul.mubr.f32.gmra.mxu0 %v186
  %v436 = vpop.f32.mrf.mxu0
  %v437 = vadd.f32 %v300, %v436
  %v438 = vpop.f32.mrf.mxu0
  %v439 = vadd.f32 %v302, %v438
  %440 = vmatprep.mubr.f32.mxu0 0.0
  %441 = vmatmul.mubr.f32.gmra.mxu0 %v189
  %v442 = vpop.f32.mrf.mxu0
  %v443 = vadd.f32 %v306, %v442
  %v444 = vpop.f32.mrf.mxu0
  %v445 = vadd.f32 %v308, %v444
  %446 = vmatprep.mubr.f32.mxu0 0.0
  %447 = vmatmul.mubr.f32.gmra.mxu0 %v192
  %v448 = vpop.f32.mrf.mxu0
  %v449 = vadd.f32 %v312, %v448
  %v450 = vpop.f32.mrf.mxu0
  %v451 = vadd.f32 %v314, %v450
  %452 = vmatprep.mubr.f32.mxu0 0.0
  %453 = vmatmul.mubr.f32.gmra.mxu0 %v195
  %v454 = vpop.f32.mrf.mxu0
  %v455 = vadd.f32 %v318, %v454
  %v456 = vpop.f32.mrf.mxu0
  %v457 = vadd.f32 %v320, %v456
  %458 = vmatprep.mubr.f32.mxu0 0.0
  %459 = vmatmul.mubr.f32.gmra.mxu0 %v198
  %v460 = vpop.f32.mrf.mxu0
  %v461 = vadd.f32 %v324, %v460
  %v462 = vpop.f32.mrf.mxu0
  %v463 = vadd.f32 %v326, %v462
  %464 = vmatprep.mubr.f32.mxu0 0.0
  %465 = vmatmul.mubr.f32.gmra.mxu0 %v201
  %v466 = vpop.f32.mrf.mxu0
  %v467 = vadd.f32 %v330, %v466
  %v468 = vpop.f32.mrf.mxu0
  %v469 = vadd.f32 %v332, %v468
  %470 = vmatprep.mubr.f32.mxu0 0.0
  %471 = vmatmul.mubr.f32.gmra.mxu0 %v204
  %v472 = vpop.f32.mrf.mxu0
  %v473 = vadd.f32 %v336, %v472
  %v474 = vpop.f32.mrf.mxu0
  %v475 = vadd.f32 %v338, %v474
  %476 = vmatprep.mubr.f32.mxu0 0.0
  %477 = vmatmul.mubr.f32.gmra.mxu0 %v207
  %v478 = vpop.f32.mrf.mxu0
  %v479 = vadd.f32 %v342, %v478
  %v480 = vpop.f32.mrf.mxu0
  %v481 = vadd.f32 %v344, %v480
  %482 = vdwg.mxu0
  %v483 = vmax.f32 %v413, 0.0
  %v484 = vmax.f32 %v415, 0.0
  %v485 = vmax.f32 %v419, 0.0
  %v486 = vmax.f32 %v421, 0.0
  %v487 = vmax.f32 %v425, 0.0
  %v488 = vmax.f32 %v427, 0.0
  %v489 = vmax.f32 %v431, 0.0
  %v490 = vmax.f32 %v433, 0.0
  %v491 = vmax.f32 %v437, 0.0
  %v492 = vmax.f32 %v439, 0.0
  %v493 = vmax.f32 %v443, 0.0
  %v494 = vmax.f32 %v445, 0.0
  %v495 = vmax.f32 %v449, 0.0
  %v496 = vmax.f32 %v451, 0.0
  %v497 = vmax.f32 %v455, 0.0
  %v498 = vmax.f32 %v457, 0.0
  %v499 = vmax.f32 %v461, 0.0
  %v500 = vmax.f32 %v463, 0.0
  %v501 = vmax.f32 %v467, 0.0
  %v502 = vmax.f32 %v469, 0.0
  %v503 = vmax.f32 %v473, 0.0
  %v504 = vmax.f32 %v475, 0.0
  %v505 = vmax.f32 %v479, 0.0
  %v506 = vmax.f32 %v481, 0.0
  %507 = vst [vmem:[#allocation2] sm:$0xff] %v483
  %508 = vst [vmem:[#allocation2 + $0x8] sm:$0xff] %v484
  %509 = vst [vmem:[#allocation2 + $0x10] sm:$0xff] %v485
  %510 = vst [vmem:[#allocation2 + $0x18] sm:$0xff] %v486
  %511 = vst [vmem:[#allocation2 + $0x20] sm:$0xff] %v487
  %512 = vst [vmem:[#allocation2 + $0x28] sm:$0xff] %v488
  %513 = vst [vmem:[#allocation2 + $0x30] sm:$0xff] %v489
  %514 = vst [vmem:[#allocation2 + $0x38] sm:$0xff] %v490
  %515 = vst [vmem:[#allocation2 + $0x40] sm:$0xff] %v491
  %516 = vst [vmem:[#allocation2 + $0x48] sm:$0xff] %v492
  %517 = vst [vmem:[#allocation2 + $0x50] sm:$0xff] %v493
  %518 = vst [vmem:[#allocation2 + $0x58] sm:$0xff] %v494
  %519 = vst [vmem:[#allocation2 + $0x60] sm:$0xff] %v495
  %520 = vst [vmem:[#allocation2 + $0x68] sm:$0xff] %v496
  %521 = vst [vmem:[#allocation2 + $0x70] sm:$0xff] %v497
  %522 = vst [vmem:[#allocation2 + $0x78] sm:$0xff] %v498
  %523 = vst [vmem:[#allocation2 + $0x80] sm:$0xff] %v499
  %524 = vst [vmem:[#allocation2 + $0x88] sm:$0xff] %v500
  %525 = vst [vmem:[#allocation2 + $0x90] sm:$0xff] %v501
  %526 = vst [vmem:[#allocation2 + $0x98] sm:$0xff] %v502
  %527 = vst [vmem:[#allocation2 + $0xa0] sm:$0xff] %v503
  %528 = vst [vmem:[#allocation2 + $0xa8] sm:$0xff] %v504
  %529 = vst [vmem:[#allocation2 + $0xb0] sm:$0xff] %v505
  %530 = vst [vmem:[#allocation2 + $0xb8] sm:$0xff] %v506
  %v531 = vld [vmem:[#allocation2] sm:$0xff]
  %v532 = vld [vmem:[#allocation2 + $0x8] sm:$0xff]
  %v533 = vld [vmem:[#allocation2 + $0x10] sm:$0xff]
  %v534 = vld [vmem:[#allocation2 + $0x18] sm:$0xff]
  %v535 = vld [vmem:[#allocation2 + $0x20] sm:$0xff]
  %v536 = vld [vmem:[#allocation2 + $0x28] sm:$0xff]
  %v537 = vld [vmem:[#allocation2 + $0x30] sm:$0xff]
  %v538 = vld [vmem:[#allocation2 + $0x38] sm:$0xff]
  %v539 = vld [vmem:[#allocation2 + $0x40] sm:$0xff]
  %v540 = vld [vmem:[#allocation2 + $0x48] sm:$0xff]
  %v541 = vld [vmem:[#allocation2 + $0x50] sm:$0xff]
  %v542 = vld [vmem:[#allocation2 + $0x58] sm:$0xff]
  %v543 = vld [vmem:[#allocation2 + $0x60] sm:$0xff]
  %v544 = vld [vmem:[#allocation2 + $0x68] sm:$0xff]
  %v545 = vld [vmem:[#allocation2 + $0x70] sm:$0xff]
  %v546 = vld [vmem:[#allocation2 + $0x78] sm:$0xff]
  %v547 = vld [vmem:[#allocation2 + $0x80] sm:$0xff]
  %v548 = vld [vmem:[#allocation2 + $0x88] sm:$0xff]
  %v549 = vld [vmem:[#allocation2 + $0x90] sm:$0xff]
  %v550 = vld [vmem:[#allocation2 + $0x98] sm:$0xff]
  %v551 = vld [vmem:[%s4] sm:$0xff]
  %v552 = vld [vmem:[%s4 + $0x8] sm:$0xff]
  %v553 = vld [vmem:[%s4 + $0x10] sm:$0xff]
  %v554 = vld [vmem:[%s4 + $0x18] sm:$0xff]
  %v555 = vld [vmem:[%s4 + $0x20] sm:$0xff]
  %v556 = vld [vmem:[%s4 + $0x28] sm:$0xff]
  %v557 = vld [vmem:[%s4 + $0x30] sm:$0xff]
  %v558 = vld [vmem:[%s4 + $0x38] sm:$0xff]
  %v559 = vld [vmem:[%s4 + $0x40] sm:$0xff]
  %v560 = vld [vmem:[%s4 + $0x48] sm:$0xff]
  %v561 = vld [vmem:[%s4 + $0x50] sm:$0xff]
  %v562 = vld [vmem:[%s4 + $0x58] sm:$0xff]
  %v563 = vld [vmem:[%s4 + $0x60] sm:$0xff]
  %v564 = vld [vmem:[%s4 + $0x68] sm:$0xff]
  %v565 = vld [vmem:[%s4 + $0x70] sm:$0xff]
  %v566 = vld [vmem:[%s4 + $0x78] sm:$0xff]
  %v567 = vld [vmem:[%s4 + $0x80] sm:$0xff]
  %v568 = vld [vmem:[%s4 + $0x88] sm:$0xff]
  %v569 = vld [vmem:[%s4 + $0x90] sm:$0xff]
  %v570 = vld [vmem:[%s4 + $0x98] sm:$0xff]
  %v571 = vld [vmem:[%s4 + $0xa0] sm:$0xff]
  %v572 = vld [vmem:[%s4 + $0xa8] sm:$0xff]
  %v573 = vld [vmem:[%s4 + $0xb0] sm:$0xff]
  %v574 = vld [vmem:[%s4 + $0xb8] sm:$0xff]
  %v575 = vld [vmem:[%s4 + $0xc0] sm:$0xff]
  %v576 = vld [vmem:[%s4 + $0xc8] sm:$0xff]
  %v577 = vld [vmem:[%s4 + $0xd0] sm:$0xff]
  %v578 = vld [vmem:[%s4 + $0xd8] sm:$0xff]
  %v579 = vld [vmem:[%s4 + $0xe0] sm:$0xff]
  %v580 = vld [vmem:[%s4 + $0xe8] sm:$0xff]
  %v581 = vld [vmem:[%s4 + $0xf0] sm:$0xff]
  %v582 = vld [vmem:[%s4 + $0xf8] sm:$0xff]
  %v583 = vld [vmem:[#allocation2 + $0xa0] sm:$0xff]
  %v584 = vld [vmem:[#allocation2 + $0xa8] sm:$0xff]
  %s585 = scalar_lea.vmem %s4, 256
  %v586 = vld [vmem:[%s585] sm:$0xff]
  %v587 = vld [vmem:[%s585 + $0x8] sm:$0xff]
  %v588 = vld [vmem:[%s585 + $0x10] sm:$0xff]
  %v589 = vld [vmem:[%s585 + $0x18] sm:$0xff]
  %v590 = vld [vmem:[%s585 + $0x20] sm:$0xff]
  %v591 = vld [vmem:[%s585 + $0x28] sm:$0xff]
  %v592 = vld [vmem:[%s585 + $0x30] sm:$0xff]
  %v593 = vld [vmem:[%s585 + $0x38] sm:$0xff]
  %v594 = vld [vmem:[%s585 + $0x40] sm:$0xff]
  %v595 = vld [vmem:[%s585 + $0x48] sm:$0xff]
  %v596 = vld [vmem:[%s585 + $0x50] sm:$0xff]
  %v597 = vld [vmem:[%s585 + $0x58] sm:$0xff]
  %v598 = vld [vmem:[%s585 + $0x60] sm:$0xff]
  %v599 = vld [vmem:[%s585 + $0x68] sm:$0xff]
  %v600 = vld [vmem:[%s585 + $0x70] sm:$0xff]
  %v601 = vld [vmem:[%s585 + $0x78] sm:$0xff]
  %v602 = vld [vmem:[%s585 + $0x80] sm:$0xff]
  %v603 = vld [vmem:[%s585 + $0x88] sm:$0xff]
  %v604 = vld [vmem:[%s585 + $0x90] sm:$0xff]
  %v605 = vld [vmem:[%s585 + $0x98] sm:$0xff]
  %v606 = vld [vmem:[%s585 + $0xa0] sm:$0xff]
  %v607 = vld [vmem:[%s585 + $0xa8] sm:$0xff]
  %v608 = vld [vmem:[%s585 + $0xb0] sm:$0xff]
  %v609 = vld [vmem:[%s585 + $0xb8] sm:$0xff]
  %v610 = vld [vmem:[%s585 + $0xc0] sm:$0xff]
  %v611 = vld [vmem:[%s585 + $0xc8] sm:$0xff]
  %v612 = vld [vmem:[%s585 + $0xd0] sm:$0xff]
  %v613 = vld [vmem:[%s585 + $0xd8] sm:$0xff]
  %v614 = vld [vmem:[%s585 + $0xe0] sm:$0xff]
  %v615 = vld [vmem:[%s585 + $0xe8] sm:$0xff]
  %v616 = vld [vmem:[%s585 + $0xf0] sm:$0xff]
  %v617 = vld [vmem:[%s585 + $0xf8] sm:$0xff]
  %618 = vmatprep.subr.mxu0 0.0
  %619 = vmatpush1.msra.mxu0 %v601
  %620 = vmatprep.subr.mxu0 0.0
  %621 = vmatpush1.msra.mxu0 %v600
  %622 = vmatprep.subr.mxu0 0.0
  %623 = vmatpush1.msra.mxu0 %v599
  %624 = vmatprep.subr.mxu0 0.0
  %625 = vmatpush1.msra.mxu0 %v598
  %626 = vmatprep.subr.mxu0 0.0
  %627 = vmatpush1.msra.mxu0 %v597
  %628 = vmatprep.subr.mxu0 0.0
  %629 = vmatpush1.msra.mxu0 %v596
  %630 = vmatprep.subr.mxu0 0.0
  %631 = vmatpush1.msra.mxu0 %v595
  %632 = vmatprep.subr.mxu0 0.0
  %633 = vmatpush1.msra.mxu0 %v594
  %634 = vmatprep.subr.mxu0 0.0
  %635 = vmatpush1.msra.mxu0 %v593
  %636 = vmatprep.subr.mxu0 0.0
  %637 = vmatpush1.msra.mxu0 %v592
  %638 = vmatprep.subr.mxu0 0.0
  %639 = vmatpush1.msra.mxu0 %v591
  %640 = vmatprep.subr.mxu0 0.0
  %641 = vmatpush1.msra.mxu0 %v590
  %642 = vmatprep.subr.mxu0 0.0
  %643 = vmatpush1.msra.mxu0 %v589
  %644 = vmatprep.subr.mxu0 0.0
  %645 = vmatpush1.msra.mxu0 %v588
  %646 = vmatprep.subr.mxu0 0.0
  %647 = vmatpush1.msra.mxu0 %v587
  %648 = vmatprep.subr.mxu0 0.0
  %649 = vmatpush1.msra.mxu0 %v586
  %650 = vmatprep.subr.mxu0 0.0
  %651 = vmatpush2.msra.mxu0 %v617
  %652 = vmatprep.subr.mxu0 0.0
  %653 = vmatpush2.msra.mxu0 %v616
  %654 = vmatprep.subr.mxu0 0.0
  %655 = vmatpush2.msra.mxu0 %v615
  %656 = vmatprep.subr.mxu0 0.0
  %657 = vmatpush2.msra.mxu0 %v614
  %658 = vmatprep.subr.mxu0 0.0
  %659 = vmatpush2.msra.mxu0 %v613
  %660 = vmatprep.subr.mxu0 0.0
  %661 = vmatpush2.msra.mxu0 %v612
  %662 = vmatprep.subr.mxu0 0.0
  %663 = vmatpush2.msra.mxu0 %v611
  %664 = vmatprep.subr.mxu0 0.0
  %665 = vmatpush2.msra.mxu0 %v610
  %666 = vmatprep.subr.mxu0 0.0
  %667 = vmatpush2.msra.mxu0 %v609
  %668 = vmatprep.subr.mxu0 0.0
  %669 = vmatpush2.msra.mxu0 %v608
  %670 = vmatprep.subr.mxu0 0.0
  %671 = vmatpush2.msra.mxu0 %v607
  %672 = vmatprep.subr.mxu0 0.0
  %673 = vmatpush2.msra.mxu0 %v606
  %674 = vmatprep.subr.mxu0 0.0
  %675 = vmatpush2.msra.mxu0 %v605
  %676 = vmatprep.subr.mxu0 0.0
  %677 = vmatpush2.msra.mxu0 %v604
  %678 = vmatprep.subr.mxu0 0.0
  %679 = vmatpush2.msra.mxu0 %v603
  %680 = vmatprep.subr.mxu0 0.0
  %681 = vmatpush2.msra.mxu0 %v602
  %682 = vmatprep.mubr.f32.mxu0 %v534
  %683 = vmatmul.mubr.f32.gmra.mxu0 %v533
  %v684 = vpop.f32.mrf.mxu0
  %v685 = vadd.f32 0.0, %v684
  %v686 = vpop.f32.mrf.mxu0
  %687 = vmatprep.mubr.f32.mxu0 %v536
  %688 = vmatmul.mubr.f32.gmra.mxu0 %v535
  %v689 = vpop.f32.mrf.mxu0
  %v690 = vadd.f32 0.0, %v689
  %v691 = vpop.f32.mrf.mxu0
  %692 = vmatprep.mubr.f32.mxu0 %v538
  %693 = vmatmul.mubr.f32.gmra.mxu0 %v537
  %v694 = vpop.f32.mrf.mxu0
  %v695 = vadd.f32 0.0, %v694
  %v696 = vpop.f32.mrf.mxu0
  %697 = vmatprep.mubr.f32.mxu0 %v540
  %698 = vmatmul.mubr.f32.gmra.mxu0 %v539
  %v699 = vpop.f32.mrf.mxu0
  %v700 = vadd.f32 0.0, %v699
  %v701 = vpop.f32.mrf.mxu0
  %702 = vmatprep.mubr.f32.mxu0 %v542
  %703 = vmatmul.mubr.f32.gmra.mxu0 %v541
  %v704 = vpop.f32.mrf.mxu0
  %v705 = vadd.f32 0.0, %v704
  %v706 = vpop.f32.mrf.mxu0
  %707 = vmatprep.mubr.f32.mxu0 %v544
  %708 = vmatmul.mubr.f32.gmra.mxu0 %v543
  %v709 = vpop.f32.mrf.mxu0
  %v710 = vadd.f32 0.0, %v709
  %v711 = vpop.f32.mrf.mxu0
  %712 = vmatprep.mubr.f32.mxu0 %v546
  %713 = vmatmul.mubr.f32.gmra.mxu0 %v545
  %v714 = vpop.f32.mrf.mxu0
  %v715 = vadd.f32 0.0, %v714
  %v716 = vpop.f32.mrf.mxu0
  %717 = vmatprep.mubr.f32.mxu0 %v548
  %718 = vmatmul.mubr.f32.gmra.mxu0 %v547
  %v719 = vpop.f32.mrf.mxu0
  %v720 = vadd.f32 0.0, %v719
  %v721 = vpop.f32.mrf.mxu0
  %722 = vmatprep.mubr.f32.mxu0 %v550
  %723 = vmatmul.mubr.f32.gmra.mxu0 %v549
  %v724 = vpop.f32.mrf.mxu0
  %v725 = vadd.f32 0.0, %v724
  %v726 = vpop.f32.mrf.mxu0
  %727 = vmatprep.mubr.f32.mxu0 %v584
  %728 = vmatmul.mubr.f32.gmra.mxu0 %v583
  %v729 = vpop.f32.mrf.mxu0
  %v730 = vadd.f32 0.0, %v729
  %v731 = vpop.f32.mrf.mxu0
  %732 = vdwg.mxu0
  %733 = vmatprep.subr.mxu0 0.0
  %734 = vmatpush1.msra.mxu0 %v566
  %735 = vmatprep.subr.mxu0 0.0
  %736 = vmatpush1.msra.mxu0 %v565
  %737 = vmatprep.subr.mxu0 0.0
  %738 = vmatpush1.msra.mxu0 %v564
  %739 = vmatprep.subr.mxu0 0.0
  %740 = vmatpush1.msra.mxu0 %v563
  %741 = vmatprep.subr.mxu0 0.0
  %742 = vmatpush1.msra.mxu0 %v562
  %743 = vmatprep.subr.mxu0 0.0
  %744 = vmatpush1.msra.mxu0 %v561
  %745 = vmatprep.subr.mxu0 0.0
  %746 = vmatpush1.msra.mxu0 %v560
  %747 = vmatprep.subr.mxu0 0.0
  %748 = vmatpush1.msra.mxu0 %v559
  %749 = vmatprep.subr.mxu0 0.0
  %750 = vmatpush1.msra.mxu0 %v558
  %751 = vmatprep.subr.mxu0 0.0
  %752 = vmatpush1.msra.mxu0 %v557
  %753 = vmatprep.subr.mxu0 0.0
  %754 = vmatpush1.msra.mxu0 %v556
  %755 = vmatprep.subr.mxu0 0.0
  %756 = vmatpush1.msra.mxu0 %v555
  %757 = vmatprep.subr.mxu0 0.0
  %758 = vmatpush1.msra.mxu0 %v554
  %759 = vmatprep.subr.mxu0 0.0
  %760 = vmatpush1.msra.mxu0 %v553
  %761 = vmatprep.subr.mxu0 0.0
  %762 = vmatpush1.msra.mxu0 %v552
  %763 = vmatprep.subr.mxu0 0.0
  %764 = vmatpush1.msra.mxu0 %v551
  %765 = vmatprep.subr.mxu0 0.0
  %766 = vmatpush2.msra.mxu0 %v582
  %767 = vmatprep.subr.mxu0 0.0
  %768 = vmatpush2.msra.mxu0 %v581
  %769 = vmatprep.subr.mxu0 0.0
  %770 = vmatpush2.msra.mxu0 %v580
  %771 = vmatprep.subr.mxu0 0.0
  %772 = vmatpush2.msra.mxu0 %v579
  %773 = vmatprep.subr.mxu0 0.0
  %774 = vmatpush2.msra.mxu0 %v578
  %775 = vmatprep.subr.mxu0 0.0
  %776 = vmatpush2.msra.mxu0 %v577
  %777 = vmatprep.subr.mxu0 0.0
  %778 = vmatpush2.msra.mxu0 %v576
  %779 = vmatprep.subr.mxu0 0.0
  %780 = vmatpush2.msra.mxu0 %v575
  %781 = vmatprep.subr.mxu0 0.0
  %782 = vmatpush2.msra.mxu0 %v574
  %783 = vmatprep.subr.mxu0 0.0
  %784 = vmatpush2.msra.mxu0 %v573
  %785 = vmatprep.subr.mxu0 0.0
  %786 = vmatpush2.msra.mxu0 %v572
  %787 = vmatprep.subr.mxu0 0.0
  %788 = vmatpush2.msra.mxu0 %v571
  %789 = vmatprep.subr.mxu0 0.0
  %790 = vmatpush2.msra.mxu0 %v570
  %791 = vmatprep.subr.mxu0 0.0
  %792 = vmatpush2.msra.mxu0 %v569
  %793 = vmatprep.subr.mxu0 0.0
  %794 = vmatpush2.msra.mxu0 %v568
  %795 = vmatprep.subr.mxu0 0.0
  %796 = vmatpush2.msra.mxu0 %v567
  %797 = vmatprep.mubr.f32.mxu0 %v532
  %798 = vmatmul.mubr.f32.gmra.mxu0 %v531
  %v799 = vpop.f32.mrf.mxu0
  %v800 = vadd.f32 %v685, %v799
  %v801 = vpop.f32.mrf.mxu0
  %802 = vmatprep.mubr.f32.mxu0 %v534
  %803 = vmatmul.mubr.f32.gmra.mxu0 %v533
  %v804 = vpop.f32.mrf.mxu0
  %v805 = vadd.f32 %v690, %v804
  %v806 = vpop.f32.mrf.mxu0
  %807 = vmatprep.mubr.f32.mxu0 %v536
  %808 = vmatmul.mubr.f32.gmra.mxu0 %v535
  %v809 = vpop.f32.mrf.mxu0
  %v810 = vadd.f32 %v695, %v809
  %v811 = vpop.f32.mrf.mxu0
  %812 = vmatprep.mubr.f32.mxu0 %v538
  %813 = vmatmul.mubr.f32.gmra.mxu0 %v537
  %v814 = vpop.f32.mrf.mxu0
  %v815 = vadd.f32 %v700, %v814
  %v816 = vpop.f32.mrf.mxu0
  %817 = vmatprep.mubr.f32.mxu0 %v540
  %818 = vmatmul.mubr.f32.gmra.mxu0 %v539
  %v819 = vpop.f32.mrf.mxu0
  %v820 = vadd.f32 %v705, %v819
  %v821 = vpop.f32.mrf.mxu0
  %822 = vmatprep.mubr.f32.mxu0 %v542
  %823 = vmatmul.mubr.f32.gmra.mxu0 %v541
  %v824 = vpop.f32.mrf.mxu0
  %v825 = vadd.f32 %v710, %v824
  %v826 = vpop.f32.mrf.mxu0
  %827 = vmatprep.mubr.f32.mxu0 %v544
  %828 = vmatmul.mubr.f32.gmra.mxu0 %v543
  %v829 = vpop.f32.mrf.mxu0
  %v830 = vadd.f32 %v715, %v829
  %v831 = vpop.f32.mrf.mxu0
  %832 = vmatprep.mubr.f32.mxu0 %v546
  %833 = vmatmul.mubr.f32.gmra.mxu0 %v545
  %v834 = vpop.f32.mrf.mxu0
  %v835 = vadd.f32 %v720, %v834
  %v836 = vpop.f32.mrf.mxu0
  %837 = vmatprep.mubr.f32.mxu0 %v548
  %838 = vmatmul.mubr.f32.gmra.mxu0 %v547
  %v839 = vpop.f32.mrf.mxu0
  %v840 = vadd.f32 %v725, %v839
  %v841 = vpop.f32.mrf.mxu0
  %842 = vmatprep.mubr.f32.mxu0 %v550
  %843 = vmatmul.mubr.f32.gmra.mxu0 %v549
  %v844 = vpop.f32.mrf.mxu0
  %v845 = vadd.f32 %v730, %v844
  %v846 = vpop.f32.mrf.mxu0
  %847 = vdwg.mxu0
  %v848 = vld [vmem:[#allocation2 + $0x20] sm:$0xff]
  %v849 = vld [vmem:[#allocation2 + $0x28] sm:$0xff]
  %v850 = vld [vmem:[#allocation2 + $0x30] sm:$0xff]
  %v851 = vld [vmem:[#allocation2 + $0x38] sm:$0xff]
  %v852 = vld [vmem:[#allocation2 + $0x40] sm:$0xff]
  %v853 = vld [vmem:[#allocation2 + $0x48] sm:$0xff]
  %v854 = vld [vmem:[#allocation2 + $0x50] sm:$0xff]
  %v855 = vld [vmem:[#allocation2 + $0x58] sm:$0xff]
  %v856 = vld [vmem:[#allocation2 + $0x60] sm:$0xff]
  %v857 = vld [vmem:[#allocation2 + $0x68] sm:$0xff]
  %v858 = vld [vmem:[#allocation2 + $0x70] sm:$0xff]
  %v859 = vld [vmem:[#allocation2 + $0x78] sm:$0xff]
  %v860 = vld [vmem:[#allocation2 + $0x80] sm:$0xff]
  %v861 = vld [vmem:[#allocation2 + $0x88] sm:$0xff]
  %v862 = vld [vmem:[#allocation2 + $0x90] sm:$0xff]
  %v863 = vld [vmem:[#allocation2 + $0x98] sm:$0xff]
  %v864 = vld [vmem:[#allocation2 + $0xa0] sm:$0xff]
  %v865 = vld [vmem:[#allocation2 + $0xa8] sm:$0xff]
  %v866 = vld [vmem:[#allocation2 + $0xb0] sm:$0xff]
  %v867 = vld [vmem:[#allocation2 + $0xb8] sm:$0xff]
  %s868 = scalar_lea.vmem %s4, 512
  %v869 = vld [vmem:[%s868] sm:$0xff]
  %v870 = vld [vmem:[%s868 + $0x8] sm:$0xff]
  %v871 = vld [vmem:[%s868 + $0x10] sm:$0xff]
  %v872 = vld [vmem:[%s868 + $0x18] sm:$0xff]
  %v873 = vld [vmem:[%s868 + $0x20] sm:$0xff]
  %v874 = vld [vmem:[%s868 + $0x28] sm:$0xff]
  %v875 = vld [vmem:[%s868 + $0x30] sm:$0xff]
  %v876 = vld [vmem:[%s868 + $0x38] sm:$0xff]
  %v877 = vld [vmem:[%s868 + $0x40] sm:$0xff]
  %v878 = vld [vmem:[%s868 + $0x48] sm:$0xff]
  %v879 = vld [vmem:[%s868 + $0x50] sm:$0xff]
  %v880 = vld [vmem:[%s868 + $0x58] sm:$0xff]
  %v881 = vld [vmem:[%s868 + $0x60] sm:$0xff]
  %v882 = vld [vmem:[%s868 + $0x68] sm:$0xff]
  %v883 = vld [vmem:[%s868 + $0x70] sm:$0xff]
  %v884 = vld [vmem:[%s868 + $0x78] sm:$0xff]
  %v885 = vld [vmem:[%s868 + $0x80] sm:$0xff]
  %v886 = vld [vmem:[%s868 + $0x88] sm:$0xff]
  %v887 = vld [vmem:[%s868 + $0x90] sm:$0xff]
  %v888 = vld [vmem:[%s868 + $0x98] sm:$0xff]
  %v889 = vld [vmem:[%s868 + $0xa0] sm:$0xff]
  %v890 = vld [vmem:[%s868 + $0xa8] sm:$0xff]
  %v891 = vld [vmem:[%s868 + $0xb0] sm:$0xff]
  %v892 = vld [vmem:[%s868 + $0xb8] sm:$0xff]
  %v893 = vld [vmem:[%s868 + $0xc0] sm:$0xff]
  %v894 = vld [vmem:[%s868 + $0xc8] sm:$0xff]
  %v895 = vld [vmem:[%s868 + $0xd0] sm:$0xff]
  %v896 = vld [vmem:[%s868 + $0xd8] sm:$0xff]
  %v897 = vld [vmem:[%s868 + $0xe0] sm:$0xff]
  %v898 = vld [vmem:[%s868 + $0xe8] sm:$0xff]
  %v899 = vld [vmem:[%s868 + $0xf0] sm:$0xff]
  %v900 = vld [vmem:[%s868 + $0xf8] sm:$0xff]
  %901 = vmatprep.subr.mxu0 0.0
  %902 = vmatpush1.msra.mxu0 %v884
  %903 = vmatprep.subr.mxu0 0.0
  %904 = vmatpush1.msra.mxu0 %v883
  %905 = vmatprep.subr.mxu0 0.0
  %906 = vmatpush1.msra.mxu0 %v882
  %907 = vmatprep.subr.mxu0 0.0
  %908 = vmatpush1.msra.mxu0 %v881
  %909 = vmatprep.subr.mxu0 0.0
  %910 = vmatpush1.msra.mxu0 %v880
  %911 = vmatprep.subr.mxu0 0.0
  %912 = vmatpush1.msra.mxu0 %v879
  %913 = vmatprep.subr.mxu0 0.0
  %914 = vmatpush1.msra.mxu0 %v878
  %915 = vmatprep.subr.mxu0 0.0
  %916 = vmatpush1.msra.mxu0 %v877
  %917 = vmatprep.subr.mxu0 0.0
  %918 = vmatpush1.msra.mxu0 %v876
  %919 = vmatprep.subr.mxu0 0.0
  %920 = vmatpush1.msra.mxu0 %v875
  %921 = vmatprep.subr.mxu0 0.0
  %922 = vmatpush1.msra.mxu0 %v874
  %923 = vmatprep.subr.mxu0 0.0
  %924 = vmatpush1.msra.mxu0 %v873
  %925 = vmatprep.subr.mxu0 0.0
  %926 = vmatpush1.msra.mxu0 %v872
  %927 = vmatprep.subr.mxu0 0.0
  %928 = vmatpush1.msra.mxu0 %v871
  %929 = vmatprep.subr.mxu0 0.0
  %930 = vmatpush1.msra.mxu0 %v870
  %931 = vmatprep.subr.mxu0 0.0
  %932 = vmatpush1.msra.mxu0 %v869
  %933 = vmatprep.subr.mxu0 0.0
  %934 = vmatpush2.msra.mxu0 %v900
  %935 = vmatprep.subr.mxu0 0.0
  %936 = vmatpush2.msra.mxu0 %v899
  %937 = vmatprep.subr.mxu0 0.0
  %938 = vmatpush2.msra.mxu0 %v898
  %939 = vmatprep.subr.mxu0 0.0
  %940 = vmatpush2.msra.mxu0 %v897
  %941 = vmatprep.subr.mxu0 0.0
  %942 = vmatpush2.msra.mxu0 %v896
  %943 = vmatprep.subr.mxu0 0.0
  %944 = vmatpush2.msra.mxu0 %v895
  %945 = vmatprep.subr.mxu0 0.0
  %946 = vmatpush2.msra.mxu0 %v894
  %947 = vmatprep.subr.mxu0 0.0
  %948 = vmatpush2.msra.mxu0 %v893
  %949 = vmatprep.subr.mxu0 0.0
  %950 = vmatpush2.msra.mxu0 %v892
  %951 = vmatprep.subr.mxu0 0.0
  %952 = vmatpush2.msra.mxu0 %v891
  %953 = vmatprep.subr.mxu0 0.0
  %954 = vmatpush2.msra.mxu0 %v890
  %955 = vmatprep.subr.mxu0 0.0
  %956 = vmatpush2.msra.mxu0 %v889
  %957 = vmatprep.subr.mxu0 0.0
  %958 = vmatpush2.msra.mxu0 %v888
  %959 = vmatprep.subr.mxu0 0.0
  %960 = vmatpush2.msra.mxu0 %v887
  %961 = vmatprep.subr.mxu0 0.0
  %962 = vmatpush2.msra.mxu0 %v886
  %963 = vmatprep.subr.mxu0 0.0
  %964 = vmatpush2.msra.mxu0 %v885
  %965 = vmatprep.mubr.f32.mxu0 %v849
  %966 = vmatmul.mubr.f32.gmra.mxu0 %v848
  %v967 = vpop.f32.mrf.mxu0
  %v968 = vadd.f32 0.0, %v967
  %v969 = vpop.f32.mrf.mxu0
  %970 = vmatprep.mubr.f32.mxu0 %v851
  %971 = vmatmul.mubr.f32.gmra.mxu0 %v850
  %v972 = vpop.f32.mrf.mxu0
  %v973 = vadd.f32 0.0, %v972
  %v974 = vpop.f32.mrf.mxu0
  %975 = vmatprep.mubr.f32.mxu0 %v853
  %976 = vmatmul.mubr.f32.gmra.mxu0 %v852
  %v977 = vpop.f32.mrf.mxu0
  %v978 = vadd.f32 0.0, %v977
  %v979 = vpop.f32.mrf.mxu0
  %980 = vmatprep.mubr.f32.mxu0 %v855
  %981 = vmatmul.mubr.f32.gmra.mxu0 %v854
  %v982 = vpop.f32.mrf.mxu0
  %v983 = vadd.f32 0.0, %v982
  %v984 = vpop.f32.mrf.mxu0
  %985 = vmatprep.mubr.f32.mxu0 %v857
  %986 = vmatmul.mubr.f32.gmra.mxu0 %v856
  %v987 = vpop.f32.mrf.mxu0
  %v988 = vadd.f32 0.0, %v987
  %v989 = vpop.f32.mrf.mxu0
  %990 = vmatprep.mubr.f32.mxu0 %v859
  %991 = vmatmul.mubr.f32.gmra.mxu0 %v858
  %v992 = vpop.f32.mrf.mxu0
  %v993 = vadd.f32 0.0, %v992
  %v994 = vpop.f32.mrf.mxu0
  %995 = vmatprep.mubr.f32.mxu0 %v861
  %996 = vmatmul.mubr.f32.gmra.mxu0 %v860
  %v997 = vpop.f32.mrf.mxu0
  %v998 = vadd.f32 0.0, %v997
  %v999 = vpop.f32.mrf.mxu0
  %1000 = vmatprep.mubr.f32.mxu0 %v863
  %1001 = vmatmul.mubr.f32.gmra.mxu0 %v862
  %v1002 = vpop.f32.mrf.mxu0
  %v1003 = vadd.f32 0.0, %v1002
  %v1004 = vpop.f32.mrf.mxu0
  %1005 = vmatprep.mubr.f32.mxu0 %v865
  %1006 = vmatmul.mubr.f32.gmra.mxu0 %v864
  %v1007 = vpop.f32.mrf.mxu0
  %v1008 = vadd.f32 0.0, %v1007
  %v1009 = vpop.f32.mrf.mxu0
  %1010 = vmatprep.mubr.f32.mxu0 %v867
  %1011 = vmatmul.mubr.f32.gmra.mxu0 %v866
  %v1012 = vpop.f32.mrf.mxu0
  %v1013 = vadd.f32 0.0, %v1012
  %v1014 = vpop.f32.mrf.mxu0
  %1015 = vdwg.mxu0
  %v1016 = vadd.f32 %v800, %v968
  %v1017 = vadd.f32 %v805, %v973
  %v1018 = vadd.f32 %v810, %v978
  %v1019 = vadd.f32 %v815, %v983
  %v1020 = vadd.f32 %v820, %v988
  %v1021 = vadd.f32 %v825, %v993
  %v1022 = vadd.f32 %v830, %v998
  %v1023 = vadd.f32 %v835, %v1003
  %v1024 = vadd.f32 %v840, %v1008
  %v1025 = vadd.f32 %v845, %v1013
  %v1026 = vld [vmem:[%s5] sm:$0x1]
  %v1028 = vlaneseq
  %v1029 = vshrl.u32 %v1028, 7
  %v1030 = vsub.s32 0, %v1029
  %v1031 = vrot.slane %v1026, %v1030
  %v1033 = vadd.f32 %v1016, %v1031
  %v1034 = vadd.f32 %v1017, %v1031
  %v1035 = vadd.f32 %v1018, %v1031
  %v1036 = vadd.f32 %v1019, %v1031
  %v1037 = vadd.f32 %v1020, %v1031
  %v1038 = vadd.f32 %v1021, %v1031
  %v1039 = vadd.f32 %v1022, %v1031
  %v1040 = vadd.f32 %v1023, %v1031
  %v1041 = vadd.f32 %v1024, %v1031
  %v1042 = vadd.f32 %v1025, %v1031
  %v1043 = vmax.f32 %v1033, 0.0
  %v1044 = vmax.f32 %v1034, 0.0
  %v1045 = vmax.f32 %v1035, 0.0
  %v1046 = vmax.f32 %v1036, 0.0
  %v1047 = vmax.f32 %v1037, 0.0
  %v1048 = vmax.f32 %v1038, 0.0
  %v1049 = vmax.f32 %v1039, 0.0
  %v1050 = vmax.f32 %v1040, 0.0
  %v1051 = vmax.f32 %v1041, 0.0
  %v1052 = vmax.f32 %v1042, 0.0
  %1053 = vst [vmem:[#allocation3] sm:$0xff] %v1043
  %1054 = vst [vmem:[#allocation3 + $0x8] sm:$0xff] %v1044
  %1055 = vst [vmem:[#allocation3 + $0x10] sm:$0xff] %v1045
  %1056 = vst [vmem:[#allocation3 + $0x18] sm:$0xff] %v1046
  %1057 = vst [vmem:[#allocation3 + $0x20] sm:$0xff] %v1047
  %1058 = vst [vmem:[#allocation3 + $0x28] sm:$0xff] %v1048
  %1059 = vst [vmem:[#allocation3 + $0x30] sm:$0xff] %v1049
  %1060 = vst [vmem:[#allocation3 + $0x38] sm:$0xff] %v1050
  %1061 = vst [vmem:[#allocation3 + $0x40] sm:$0xff] %v1051
  %1062 = vst [vmem:[#allocation3 + $0x48] sm:$0xff] %v1052
  %v1063 = vld [vmem:[%s1] sm:$0xff]
  %v1064 = vld [vmem:[%s6] sm:$0xff]
  %v1065 = vld [vmem:[%s7] sm:$0x1]
  %v1067 = vlaneseq
  %v1068 = vshrl.u32 %v1067, 7
  %v1069 = vsub.s32 0, %v1068
  %v1070 = vrot.slane %v1065, %v1069
  %vm1072 = vcmask 64512
  %v1074 = vsel %vm1072, %v1063, 0
  %1076 = vmatprep.subr.mxu0 0.0
  %1077 = vmatpush1.msra.mxu0 0.0
  %1078 = vmatprep.subr.mxu0 0.0
  %1079 = vmatpush1.msra.mxu0 0.0
  %1080 = vmatprep.subr.mxu0 0.0
  %1081 = vmatpush1.msra.mxu0 0.0
  %1082 = vmatprep.subr.mxu0 0.0
  %1083 = vmatpush1.msra.mxu0 0.0
  %1084 = vmatprep.subr.mxu0 0.0
  %1085 = vmatpush1.msra.mxu0 0.0
  %1086 = vmatprep.subr.mxu0 0.0
  %1087 = vmatpush1.msra.mxu0 0.0
  %1088 = vmatprep.subr.mxu0 0.0
  %1089 = vmatpush1.msra.mxu0 0.0
  %1090 = vmatprep.subr.mxu0 0.0
  %1091 = vmatpush1.msra.mxu0 0.0
  %1092 = vmatprep.subr.mxu0 0.0
  %1093 = vmatpush1.msra.mxu0 0.0
  %1094 = vmatprep.subr.mxu0 0.0
  %1095 = vmatpush1.msra.mxu0 0.0
  %1096 = vmatprep.subr.mxu0 0.0
  %1097 = vmatpush1.msra.mxu0 0.0
  %1098 = vmatprep.subr.mxu0 0.0
  %1099 = vmatpush1.msra.mxu0 0.0
  %1100 = vmatprep.subr.mxu0 0.0
  %1101 = vmatpush1.msra.mxu0 0.0
  %1102 = vmatprep.subr.mxu0 0.0
  %1103 = vmatpush1.msra.mxu0 0.0
  %1104 = vmatprep.subr.mxu0 0.0
  %1105 = vmatpush1.msra.mxu0 0.0
  %1106 = vmatprep.subr.mxu0 0.0
  %1107 = vmatpush1.msra.mxu0 %v1064
  %1108 = vmatprep.subr.mxu0 0.0
  %1109 = vmatpush2.msra.mxu0 0.0
  %1110 = vmatprep.subr.mxu0 0.0
  %1111 = vmatpush2.msra.mxu0 0.0
  %1112 = vmatprep.subr.mxu0 0.0
  %1113 = vmatpush2.msra.mxu0 0.0
  %1114 = vmatprep.subr.mxu0 0.0
  %1115 = vmatpush2.msra.mxu0 0.0
  %1116 = vmatprep.subr.mxu0 0.0
  %1117 = vmatpush2.msra.mxu0 0.0
  %1118 = vmatprep.subr.mxu0 0.0
  %1119 = vmatpush2.msra.mxu0 0.0
  %1120 = vmatprep.subr.mxu0 0.0
  %1121 = vmatpush2.msra.mxu0 0.0
  %1122 = vmatprep.subr.mxu0 0.0
  %1123 = vmatpush2.msra.mxu0 0.0
  %1124 = vmatprep.subr.mxu0 0.0
  %1125 = vmatpush2.msra.mxu0 0.0
  %1126 = vmatprep.subr.mxu0 0.0
  %1127 = vmatpush2.msra.mxu0 0.0
  %1128 = vmatprep.subr.mxu0 0.0
  %1129 = vmatpush2.msra.mxu0 0.0
  %1130 = vmatprep.subr.mxu0 0.0
  %1131 = vmatpush2.msra.mxu0 0.0
  %1132 = vmatprep.subr.mxu0 0.0
  %1133 = vmatpush2.msra.mxu0 0.0
  %1134 = vmatprep.subr.mxu0 0.0
  %1135 = vmatpush2.msra.mxu0 0.0
  %1136 = vmatprep.subr.mxu0 0.0
  %1137 = vmatpush2.msra.mxu0 0.0
  %1138 = vmatprep.subr.mxu0 0.0
  %1139 = vmatpush2.msra.mxu0 0.0
  %1140 = vmatprep.mubr.f32.mxu0 0.0
  %1141 = vmatmul.mubr.f32.gmra.mxu0 %v1074
  %v1142 = vpop.f32.mrf.mxu0
  %v1143 = vadd.f32 %v1070, %v1142
  %v1144 = vpop.f32.mrf.mxu0
  %1145 = vdwg.mxu0
  %v1146 = vmax.f32 %v1143, 0.0
  %v1147 = vld [vmem:[%s9] sm:$0xff]
  %v1148 = vld [vmem:[%s10] sm:$0x1]
  %v1150 = vlaneseq
  %v1151 = vshrl.u32 %v1150, 7
  %v1152 = vsub.s32 0, %v1151
  %v1153 = vrot.slane %v1148, %v1152
  %v1156 = vsel %vm1072, %v1146, 0
  %1158 = vmatprep.subr.mxu0 0.0
  %1159 = vmatpush1.msra.mxu0 0.0
  %1160 = vmatprep.subr.mxu0 0.0
  %1161 = vmatpush1.msra.mxu0 0.0
  %1162 = vmatprep.subr.mxu0 0.0
  %1163 = vmatpush1.msra.mxu0 0.0
  %1164 = vmatprep.subr.mxu0 0.0
  %1165 = vmatpush1.msra.mxu0 0.0
  %1166 = vmatprep.subr.mxu0 0.0
  %1167 = vmatpush1.msra.mxu0 0.0
  %1168 = vmatprep.subr.mxu0 0.0
  %1169 = vmatpush1.msra.mxu0 0.0
  %1170 = vmatprep.subr.mxu0 0.0
  %1171 = vmatpush1.msra.mxu0 0.0
  %1172 = vmatprep.subr.mxu0 0.0
  %1173 = vmatpush1.msra.mxu0 0.0
  %1174 = vmatprep.subr.mxu0 0.0
  %1175 = vmatpush1.msra.mxu0 0.0
  %1176 = vmatprep.subr.mxu0 0.0
  %1177 = vmatpush1.msra.mxu0 0.0
  %1178 = vmatprep.subr.mxu0 0.0
  %1179 = vmatpush1.msra.mxu0 0.0
  %1180 = vmatprep.subr.mxu0 0.0
  %1181 = vmatpush1.msra.mxu0 0.0
  %1182 = vmatprep.subr.mxu0 0.0
  %1183 = vmatpush1.msra.mxu0 0.0
  %1184 = vmatprep.subr.mxu0 0.0
  %1185 = vmatpush1.msra.mxu0 0.0
  %1186 = vmatprep.subr.mxu0 0.0
  %1187 = vmatpush1.msra.mxu0 0.0
  %1188 = vmatprep.subr.mxu0 0.0
  %1189 = vmatpush1.msra.mxu0 %v1147
  %1190 = vmatprep.subr.mxu0 0.0
  %1191 = vmatpush2.msra.mxu0 0.0
  %1192 = vmatprep.subr.mxu0 0.0
  %1193 = vmatpush2.msra.mxu0 0.0
  %1194 = vmatprep.subr.mxu0 0.0
  %1195 = vmatpush2.msra.mxu0 0.0
  %1196 = vmatprep.subr.mxu0 0.0
  %1197 = vmatpush2.msra.mxu0 0.0
  %1198 = vmatprep.subr.mxu0 0.0
  %1199 = vmatpush2.msra.mxu0 0.0
  %1200 = vmatprep.subr.mxu0 0.0
  %1201 = vmatpush2.msra.mxu0 0.0
  %1202 = vmatprep.subr.mxu0 0.0
  %1203 = vmatpush2.msra.mxu0 0.0
  %1204 = vmatprep.subr.mxu0 0.0
  %1205 = vmatpush2.msra.mxu0 0.0
  %1206 = vmatprep.subr.mxu0 0.0
  %1207 = vmatpush2.msra.mxu0 0.0
  %1208 = vmatprep.subr.mxu0 0.0
  %1209 = vmatpush2.msra.mxu0 0.0
  %1210 = vmatprep.subr.mxu0 0.0
  %1211 = vmatpush2.msra.mxu0 0.0
  %1212 = vmatprep.subr.mxu0 0.0
  %1213 = vmatpush2.msra.mxu0 0.0
  %1214 = vmatprep.subr.mxu0 0.0
  %1215 = vmatpush2.msra.mxu0 0.0
  %1216 = vmatprep.subr.mxu0 0.0
  %1217 = vmatpush2.msra.mxu0 0.0
  %1218 = vmatprep.subr.mxu0 0.0
  %1219 = vmatpush2.msra.mxu0 0.0
  %1220 = vmatprep.subr.mxu0 0.0
  %1221 = vmatpush2.msra.mxu0 0.0
  %1222 = vmatprep.mubr.f32.mxu0 0.0
  %1223 = vmatmul.mubr.f32.gmra.mxu0 %v1156
  %v1224 = vpop.f32.mrf.mxu0
  %v1225 = vadd.f32 %v1153, %v1224
  %v1226 = vpop.f32.mrf.mxu0
  %1227 = vdwg.mxu0
  %v1228 = vld [vmem:[#allocation3] sm:$0xff]
  %v1229 = vld [vmem:[#allocation3 + $0x8] sm:$0xff]
  %v1230 = vld [vmem:[#allocation3 + $0x10] sm:$0xff]
  %v1231 = vld [vmem:[#allocation3 + $0x18] sm:$0xff]
  %v1232 = vld [vmem:[#allocation3 + $0x20] sm:$0xff]
  %v1233 = vld [vmem:[#allocation3 + $0x28] sm:$0xff]
  %v1234 = vld [vmem:[#allocation3 + $0x30] sm:$0xff]
  %v1235 = vld [vmem:[#allocation3 + $0x38] sm:$0xff]
  %v1236 = vld [vmem:[#allocation3 + $0x40] sm:$0xff]
  %v1237 = vld [vmem:[#allocation3 + $0x48] sm:$0xff]
  %v1238 = vld [vmem:[%s8] sm:$0xff]
  %v1239 = vld [vmem:[%s8 + $0x8] sm:$0xff]
  %v1240 = vld [vmem:[%s8 + $0x10] sm:$0xff]
  %v1241 = vld [vmem:[%s8 + $0x18] sm:$0xff]
  %v1242 = vld [vmem:[%s8 + $0x20] sm:$0xff]
  %v1243 = vld [vmem:[%s8 + $0x28] sm:$0xff]
  %v1244 = vld [vmem:[%s8 + $0x30] sm:$0xff]
  %v1245 = vld [vmem:[%s8 + $0x38] sm:$0xff]
  %v1246 = vld [vmem:[%s8 + $0x40] sm:$0xff]
  %v1247 = vld [vmem:[%s8 + $0x48] sm:$0xff]
  %v1248 = vld [vmem:[%s8 + $0x50] sm:$0xff]
  %v1249 = vld [vmem:[%s8 + $0x58] sm:$0xff]
  %v1250 = vld [vmem:[%s8 + $0x60] sm:$0xff]
  %v1251 = vld [vmem:[%s8 + $0x68] sm:$0xff]
  %v1252 = vld [vmem:[%s8 + $0x70] sm:$0xff]
  %v1253 = vld [vmem:[%s8 + $0x78] sm:$0xff]
  %v1254 = vld [vmem:[%s8 + $0x80] sm:$0xff]
  %v1255 = vld [vmem:[%s8 + $0x88] sm:$0xff]
  %v1256 = vld [vmem:[%s8 + $0x90] sm:$0xff]
  %v1257 = vld [vmem:[%s8 + $0x98] sm:$0xff]
  %v1258 = vld [vmem:[%s8 + $0xa0] sm:$0xff]
  %v1259 = vld [vmem:[%s8 + $0xa8] sm:$0xff]
  %v1260 = vld [vmem:[%s8 + $0xb0] sm:$0xff]
  %v1261 = vld [vmem:[%s8 + $0xb8] sm:$0xff]
  %v1262 = vld [vmem:[%s8 + $0xc0] sm:$0xff]
  %v1263 = vld [vmem:[%s8 + $0xc8] sm:$0xff]
  %v1264 = vld [vmem:[%s8 + $0xd0] sm:$0xff]
  %v1265 = vld [vmem:[%s8 + $0xd8] sm:$0xff]
  %v1266 = vld [vmem:[%s8 + $0xe0] sm:$0xff]
  %v1267 = vld [vmem:[%s8 + $0xe8] sm:$0xff]
  %v1268 = vld [vmem:[%s8 + $0xf0] sm:$0xff]
  %v1269 = vld [vmem:[%s8 + $0xf8] sm:$0xff]
  %v1270 = vld [vmem:[%s8 + $0x100] sm:$0xff]
  %v1271 = vld [vmem:[%s8 + $0x108] sm:$0xff]
  %v1272 = vld [vmem:[%s8 + $0x110] sm:$0xff]
  %v1273 = vld [vmem:[%s8 + $0x118] sm:$0xff]
  %v1274 = vld [vmem:[%s8 + $0x120] sm:$0xff]
  %v1275 = vld [vmem:[%s8 + $0x128] sm:$0xff]
  %v1276 = vld [vmem:[%s8 + $0x130] sm:$0xff]
  %v1277 = vld [vmem:[%s8 + $0x138] sm:$0xff]
  %v1278 = vld [vmem:[%s8 + $0x140] sm:$0xff]
  %v1279 = vld [vmem:[%s8 + $0x148] sm:$0xff]
  %v1280 = vld [vmem:[%s8 + $0x150] sm:$0xff]
  %v1281 = vld [vmem:[%s8 + $0x158] sm:$0xff]
  %v1282 = vld [vmem:[%s8 + $0x160] sm:$0xff]
  %v1283 = vld [vmem:[%s8 + $0x168] sm:$0xff]
  %v1284 = vld [vmem:[%s8 + $0x170] sm:$0xff]
  %v1285 = vld [vmem:[%s8 + $0x178] sm:$0xff]
  %v1286 = vld [vmem:[%s8 + $0x180] sm:$0xff]
  %v1287 = vld [vmem:[%s8 + $0x188] sm:$0xff]
  %v1288 = vld [vmem:[%s8 + $0x190] sm:$0xff]
  %v1289 = vld [vmem:[%s8 + $0x198] sm:$0xff]
  %v1290 = vld [vmem:[%s8 + $0x1a0] sm:$0xff]
  %v1291 = vld [vmem:[%s8 + $0x1a8] sm:$0xff]
  %v1292 = vld [vmem:[%s8 + $0x1b0] sm:$0xff]
  %v1293 = vld [vmem:[%s8 + $0x1b8] sm:$0xff]
  %v1294 = vld [vmem:[%s8 + $0x1c0] sm:$0xff]
  %v1295 = vld [vmem:[%s8 + $0x1c8] sm:$0xff]
  %v1296 = vld [vmem:[%s8 + $0x1d0] sm:$0xff]
  %v1297 = vld [vmem:[%s8 + $0x1d8] sm:$0xff]
  %v1298 = vld [vmem:[%s8 + $0x1e0] sm:$0xff]
  %v1299 = vld [vmem:[%s8 + $0x1e8] sm:$0xff]
  %v1300 = vld [vmem:[%s8 + $0x1f0] sm:$0xff]
  %v1301 = vld [vmem:[%s8 + $0x1f8] sm:$0xff]
  %v1302 = vld [vmem:[%s8 + $0x200] sm:$0xff]
  %v1303 = vld [vmem:[%s8 + $0x208] sm:$0xff]
  %v1304 = vld [vmem:[%s8 + $0x210] sm:$0xff]
  %v1305 = vld [vmem:[%s8 + $0x218] sm:$0xff]
  %v1306 = vld [vmem:[%s8 + $0x220] sm:$0xff]
  %v1307 = vld [vmem:[%s8 + $0x228] sm:$0xff]
  %v1308 = vld [vmem:[%s8 + $0x230] sm:$0xff]
  %v1309 = vld [vmem:[%s8 + $0x238] sm:$0xff]
  %v1310 = vld [vmem:[%s8 + $0x240] sm:$0xff]
  %v1311 = vld [vmem:[%s8 + $0x248] sm:$0xff]
  %v1312 = vld [vmem:[%s8 + $0x250] sm:$0xff]
  %v1313 = vld [vmem:[%s8 + $0x258] sm:$0xff]
  %v1314 = vld [vmem:[%s8 + $0x260] sm:$0xff]
  %v1315 = vld [vmem:[%s8 + $0x268] sm:$0xff]
  %v1316 = vld [vmem:[%s8 + $0x270] sm:$0xff]
  %v1317 = vld [vmem:[%s8 + $0x278] sm:$0xff]
  %v1318 = vld [vmem:[%s8 + $0x280] sm:$0xff]
  %v1319 = vld [vmem:[%s8 + $0x288] sm:$0xff]
  %v1320 = vld [vmem:[%s8 + $0x290] sm:$0xff]
  %v1321 = vld [vmem:[%s8 + $0x298] sm:$0xff]
  %v1322 = vld [vmem:[%s8 + $0x2a0] sm:$0xff]
  %v1323 = vld [vmem:[%s8 + $0x2a8] sm:$0xff]
  %v1324 = vld [vmem:[%s8 + $0x2b0] sm:$0xff]
  %v1325 = vld [vmem:[%s8 + $0x2b8] sm:$0xff]
  %v1326 = vld [vmem:[%s8 + $0x2c0] sm:$0xff]
  %v1327 = vld [vmem:[%s8 + $0x2c8] sm:$0xff]
  %v1328 = vld [vmem:[%s8 + $0x2d0] sm:$0xff]
  %v1329 = vld [vmem:[%s8 + $0x2d8] sm:$0xff]
  %v1330 = vld [vmem:[%s8 + $0x2e0] sm:$0xff]
  %v1331 = vld [vmem:[%s8 + $0x2e8] sm:$0xff]
  %v1332 = vld [vmem:[%s8 + $0x2f0] sm:$0xff]
  %v1333 = vld [vmem:[%s8 + $0x2f8] sm:$0xff]
  %v1334 = vld [vmem:[%s8 + $0x300] sm:$0xff]
  %v1335 = vld [vmem:[%s8 + $0x308] sm:$0xff]
  %v1336 = vld [vmem:[%s8 + $0x310] sm:$0xff]
  %v1337 = vld [vmem:[%s8 + $0x318] sm:$0xff]
  %v1338 = vld [vmem:[%s8 + $0x320] sm:$0xff]
  %v1339 = vld [vmem:[%s8 + $0x328] sm:$0xff]
  %v1340 = vld [vmem:[%s8 + $0x330] sm:$0xff]
  %v1341 = vld [vmem:[%s8 + $0x338] sm:$0xff]
  %v1342 = vld [vmem:[%s8 + $0x340] sm:$0xff]
  %v1343 = vld [vmem:[%s8 + $0x348] sm:$0xff]
  %v1344 = vld [vmem:[%s8 + $0x350] sm:$0xff]
  %v1345 = vld [vmem:[%s8 + $0x358] sm:$0xff]
  %v1346 = vld [vmem:[%s8 + $0x360] sm:$0xff]
  %v1347 = vld [vmem:[%s8 + $0x368] sm:$0xff]
  %v1348 = vld [vmem:[%s8 + $0x370] sm:$0xff]
  %v1349 = vld [vmem:[%s8 + $0x378] sm:$0xff]
  %v1350 = vld [vmem:[%s8 + $0x380] sm:$0xff]
  %v1351 = vld [vmem:[%s8 + $0x388] sm:$0xff]
  %v1352 = vld [vmem:[%s8 + $0x390] sm:$0xff]
  %v1353 = vld [vmem:[%s8 + $0x398] sm:$0xff]
  %v1354 = vld [vmem:[%s8 + $0x3a0] sm:$0xff]
  %v1355 = vld [vmem:[%s8 + $0x3a8] sm:$0xff]
  %v1356 = vld [vmem:[%s8 + $0x3b0] sm:$0xff]
  %v1357 = vld [vmem:[%s8 + $0x3b8] sm:$0xff]
  %v1358 = vld [vmem:[%s8 + $0x3c0] sm:$0xff]
  %v1359 = vld [vmem:[%s8 + $0x3c8] sm:$0xff]
  %v1360 = vld [vmem:[%s8 + $0x3d0] sm:$0xff]
  %v1361 = vld [vmem:[%s8 + $0x3d8] sm:$0xff]
  %v1362 = vld [vmem:[%s8 + $0x3e0] sm:$0xff]
  %v1363 = vld [vmem:[%s8 + $0x3e8] sm:$0xff]
  %v1364 = vld [vmem:[%s8 + $0x3f0] sm:$0xff]
  %v1365 = vld [vmem:[%s8 + $0x3f8] sm:$0xff]
  %v1366 = vld [vmem:[%s8 + $0x400] sm:$0xff]
  %v1367 = vld [vmem:[%s8 + $0x408] sm:$0xff]
  %v1368 = vld [vmem:[%s8 + $0x410] sm:$0xff]
  %v1369 = vld [vmem:[%s8 + $0x418] sm:$0xff]
  %v1370 = vld [vmem:[%s8 + $0x420] sm:$0xff]
  %v1371 = vld [vmem:[%s8 + $0x428] sm:$0xff]
  %v1372 = vld [vmem:[%s8 + $0x430] sm:$0xff]
  %v1373 = vld [vmem:[%s8 + $0x438] sm:$0xff]
  %v1374 = vld [vmem:[%s8 + $0x440] sm:$0xff]
  %v1375 = vld [vmem:[%s8 + $0x448] sm:$0xff]
  %v1376 = vld [vmem:[%s8 + $0x450] sm:$0xff]
  %v1377 = vld [vmem:[%s8 + $0x458] sm:$0xff]
  %v1378 = vld [vmem:[%s8 + $0x460] sm:$0xff]
  %v1379 = vld [vmem:[%s8 + $0x468] sm:$0xff]
  %v1380 = vld [vmem:[%s8 + $0x470] sm:$0xff]
  %v1381 = vld [vmem:[%s8 + $0x478] sm:$0xff]
  %v1382 = vld [vmem:[%s8 + $0x480] sm:$0xff]
  %v1383 = vld [vmem:[%s8 + $0x488] sm:$0xff]
  %v1384 = vld [vmem:[%s8 + $0x490] sm:$0xff]
  %v1385 = vld [vmem:[%s8 + $0x498] sm:$0xff]
  %v1386 = vld [vmem:[%s8 + $0x4a0] sm:$0xff]
  %v1387 = vld [vmem:[%s8 + $0x4a8] sm:$0xff]
  %v1388 = vld [vmem:[%s8 + $0x4b0] sm:$0xff]
  %v1389 = vld [vmem:[%s8 + $0x4b8] sm:$0xff]
  %v1390 = vld [vmem:[%s8 + $0x4c0] sm:$0xff]
  %v1391 = vld [vmem:[%s8 + $0x4c8] sm:$0xff]
  %v1392 = vld [vmem:[%s8 + $0x4d0] sm:$0xff]
  %v1393 = vld [vmem:[%s8 + $0x4d8] sm:$0xff]
  %v1394 = vld [vmem:[%s8 + $0x4e0] sm:$0xff]
  %v1395 = vld [vmem:[%s8 + $0x4e8] sm:$0xff]
  %v1396 = vld [vmem:[%s8 + $0x4f0] sm:$0xff]
  %v1397 = vld [vmem:[%s8 + $0x4f8] sm:$0xff]
  %1398 = vmatprep.subr.mxu0 0.0
  %1399 = vmatpush1.msra.mxu0 %v1253
  %1400 = vmatprep.subr.mxu0 0.0
  %1401 = vmatpush1.msra.mxu0 %v1252
  %1402 = vmatprep.subr.mxu0 0.0
  %1403 = vmatpush1.msra.mxu0 %v1251
  %1404 = vmatprep.subr.mxu0 0.0
  %1405 = vmatpush1.msra.mxu0 %v1250
  %1406 = vmatprep.subr.mxu0 0.0
  %1407 = vmatpush1.msra.mxu0 %v1249
  %1408 = vmatprep.subr.mxu0 0.0
  %1409 = vmatpush1.msra.mxu0 %v1248
  %1410 = vmatprep.subr.mxu0 0.0
  %1411 = vmatpush1.msra.mxu0 %v1247
  %1412 = vmatprep.subr.mxu0 0.0
  %1413 = vmatpush1.msra.mxu0 %v1246
  %1414 = vmatprep.subr.mxu0 0.0
  %1415 = vmatpush1.msra.mxu0 %v1245
  %1416 = vmatprep.subr.mxu0 0.0
  %1417 = vmatpush1.msra.mxu0 %v1244
  %1418 = vmatprep.subr.mxu0 0.0
  %1419 = vmatpush1.msra.mxu0 %v1243
  %1420 = vmatprep.subr.mxu0 0.0
  %1421 = vmatpush1.msra.mxu0 %v1242
  %1422 = vmatprep.subr.mxu0 0.0
  %1423 = vmatpush1.msra.mxu0 %v1241
  %1424 = vmatprep.subr.mxu0 0.0
  %1425 = vmatpush1.msra.mxu0 %v1240
  %1426 = vmatprep.subr.mxu0 0.0
  %1427 = vmatpush1.msra.mxu0 %v1239
  %1428 = vmatprep.subr.mxu0 0.0
  %1429 = vmatpush1.msra.mxu0 %v1238
  %1430 = vmatprep.subr.mxu0 0.0
  %1431 = vmatpush2.msra.mxu0 %v1269
  %1432 = vmatprep.subr.mxu0 0.0
  %1433 = vmatpush2.msra.mxu0 %v1268
  %1434 = vmatprep.subr.mxu0 0.0
  %1435 = vmatpush2.msra.mxu0 %v1267
  %1436 = vmatprep.subr.mxu0 0.0
  %1437 = vmatpush2.msra.mxu0 %v1266
  %1438 = vmatprep.subr.mxu0 0.0
  %1439 = vmatpush2.msra.mxu0 %v1265
  %1440 = vmatprep.subr.mxu0 0.0
  %1441 = vmatpush2.msra.mxu0 %v1264
  %1442 = vmatprep.subr.mxu0 0.0
  %1443 = vmatpush2.msra.mxu0 %v1263
  %1444 = vmatprep.subr.mxu0 0.0
  %1445 = vmatpush2.msra.mxu0 %v1262
  %1446 = vmatprep.subr.mxu0 0.0
  %1447 = vmatpush2.msra.mxu0 %v1261
  %1448 = vmatprep.subr.mxu0 0.0
  %1449 = vmatpush2.msra.mxu0 %v1260
  %1450 = vmatprep.subr.mxu0 0.0
  %1451 = vmatpush2.msra.mxu0 %v1259
  %1452 = vmatprep.subr.mxu0 0.0
  %1453 = vmatpush2.msra.mxu0 %v1258
  %1454 = vmatprep.subr.mxu0 0.0
  %1455 = vmatpush2.msra.mxu0 %v1257
  %1456 = vmatprep.subr.mxu0 0.0
  %1457 = vmatpush2.msra.mxu0 %v1256
  %1458 = vmatprep.subr.mxu0 0.0
  %1459 = vmatpush2.msra.mxu0 %v1255
  %1460 = vmatprep.subr.mxu0 0.0
  %1461 = vmatpush2.msra.mxu0 %v1254
  %1462 = vmatprep.mubr.f32.mxu0 %v1229
  %1463 = vmatmul.mubr.f32.gmra.mxu0 %v1228
  %v1464 = vpop.f32.mrf.mxu0
  %v1465 = vadd.f32 0.0, %v1464
  %v1466 = vpop.f32.mrf.mxu0
  %1467 = vdwg.mxu0
  %1468 = vmatprep.subr.mxu0 0.0
  %1469 = vmatpush1.msra.mxu0 %v1285
  %1470 = vmatprep.subr.mxu0 0.0
  %1471 = vmatpush1.msra.mxu0 %v1284
  %1472 = vmatprep.subr.mxu0 0.0
  %1473 = vmatpush1.msra.mxu0 %v1283
  %1474 = vmatprep.subr.mxu0 0.0
  %1475 = vmatpush1.msra.mxu0 %v1282
  %1476 = vmatprep.subr.mxu0 0.0
  %1477 = vmatpush1.msra.mxu0 %v1281
  %1478 = vmatprep.subr.mxu0 0.0
  %1479 = vmatpush1.msra.mxu0 %v1280
  %1480 = vmatprep.subr.mxu0 0.0
  %1481 = vmatpush1.msra.mxu0 %v1279
  %1482 = vmatprep.subr.mxu0 0.0
  %1483 = vmatpush1.msra.mxu0 %v1278
  %1484 = vmatprep.subr.mxu0 0.0
  %1485 = vmatpush1.msra.mxu0 %v1277
  %1486 = vmatprep.subr.mxu0 0.0
  %1487 = vmatpush1.msra.mxu0 %v1276
  %1488 = vmatprep.subr.mxu0 0.0
  %1489 = vmatpush1.msra.mxu0 %v1275
  %1490 = vmatprep.subr.mxu0 0.0
  %1491 = vmatpush1.msra.mxu0 %v1274
  %1492 = vmatprep.subr.mxu0 0.0
  %1493 = vmatpush1.msra.mxu0 %v1273
  %1494 = vmatprep.subr.mxu0 0.0
  %1495 = vmatpush1.msra.mxu0 %v1272
  %1496 = vmatprep.subr.mxu0 0.0
  %1497 = vmatpush1.msra.mxu0 %v1271
  %1498 = vmatprep.subr.mxu0 0.0
  %1499 = vmatpush1.msra.mxu0 %v1270
  %1500 = vmatprep.subr.mxu0 0.0
  %1501 = vmatpush2.msra.mxu0 %v1301
  %1502 = vmatprep.subr.mxu0 0.0
  %1503 = vmatpush2.msra.mxu0 %v1300
  %1504 = vmatprep.subr.mxu0 0.0
  %1505 = vmatpush2.msra.mxu0 %v1299
  %1506 = vmatprep.subr.mxu0 0.0
  %1507 = vmatpush2.msra.mxu0 %v1298
  %1508 = vmatprep.subr.mxu0 0.0
  %1509 = vmatpush2.msra.mxu0 %v1297
  %1510 = vmatprep.subr.mxu0 0.0
  %1511 = vmatpush2.msra.mxu0 %v1296
  %1512 = vmatprep.subr.mxu0 0.0
  %1513 = vmatpush2.msra.mxu0 %v1295
  %1514 = vmatprep.subr.mxu0 0.0
  %1515 = vmatpush2.msra.mxu0 %v1294
  %1516 = vmatprep.subr.mxu0 0.0
  %1517 = vmatpush2.msra.mxu0 %v1293
  %1518 = vmatprep.subr.mxu0 0.0
  %1519 = vmatpush2.msra.mxu0 %v1292
  %1520 = vmatprep.subr.mxu0 0.0
  %1521 = vmatpush2.msra.mxu0 %v1291
  %1522 = vmatprep.subr.mxu0 0.0
  %1523 = vmatpush2.msra.mxu0 %v1290
  %1524 = vmatprep.subr.mxu0 0.0
  %1525 = vmatpush2.msra.mxu0 %v1289
  %1526 = vmatprep.subr.mxu0 0.0
  %1527 = vmatpush2.msra.mxu0 %v1288
  %1528 = vmatprep.subr.mxu0 0.0
  %1529 = vmatpush2.msra.mxu0 %v1287
  %1530 = vmatprep.subr.mxu0 0.0
  %1531 = vmatpush2.msra.mxu0 %v1286
  %1532 = vmatprep.mubr.f32.mxu0 %v1231
  %1533 = vmatmul.mubr.f32.gmra.mxu0 %v1230
  %v1534 = vpop.f32.mrf.mxu0
  %v1535 = vadd.f32 %v1465, %v1534
  %v1536 = vpop.f32.mrf.mxu0
  %1537 = vdwg.mxu0
  %1538 = vmatprep.subr.mxu0 0.0
  %1539 = vmatpush1.msra.mxu0 %v1317
  %1540 = vmatprep.subr.mxu0 0.0
  %1541 = vmatpush1.msra.mxu0 %v1316
  %1542 = vmatprep.subr.mxu0 0.0
  %1543 = vmatpush1.msra.mxu0 %v1315
  %1544 = vmatprep.subr.mxu0 0.0
  %1545 = vmatpush1.msra.mxu0 %v1314
  %1546 = vmatprep.subr.mxu0 0.0
  %1547 = vmatpush1.msra.mxu0 %v1313
  %1548 = vmatprep.subr.mxu0 0.0
  %1549 = vmatpush1.msra.mxu0 %v1312
  %1550 = vmatprep.subr.mxu0 0.0
  %1551 = vmatpush1.msra.mxu0 %v1311
  %1552 = vmatprep.subr.mxu0 0.0
  %1553 = vmatpush1.msra.mxu0 %v1310
  %1554 = vmatprep.subr.mxu0 0.0
  %1555 = vmatpush1.msra.mxu0 %v1309
  %1556 = vmatprep.subr.mxu0 0.0
  %1557 = vmatpush1.msra.mxu0 %v1308
  %1558 = vmatprep.subr.mxu0 0.0
  %1559 = vmatpush1.msra.mxu0 %v1307
  %1560 = vmatprep.subr.mxu0 0.0
  %1561 = vmatpush1.msra.mxu0 %v1306
  %1562 = vmatprep.subr.mxu0 0.0
  %1563 = vmatpush1.msra.mxu0 %v1305
  %1564 = vmatprep.subr.mxu0 0.0
  %1565 = vmatpush1.msra.mxu0 %v1304
  %1566 = vmatprep.subr.mxu0 0.0
  %1567 = vmatpush1.msra.mxu0 %v1303
  %1568 = vmatprep.subr.mxu0 0.0
  %1569 = vmatpush1.msra.mxu0 %v1302
  %1570 = vmatprep.subr.mxu0 0.0
  %1571 = vmatpush2.msra.mxu0 %v1333
  %1572 = vmatprep.subr.mxu0 0.0
  %1573 = vmatpush2.msra.mxu0 %v1332
  %1574 = vmatprep.subr.mxu0 0.0
  %1575 = vmatpush2.msra.mxu0 %v1331
  %1576 = vmatprep.subr.mxu0 0.0
  %1577 = vmatpush2.msra.mxu0 %v1330
  %1578 = vmatprep.subr.mxu0 0.0
  %1579 = vmatpush2.msra.mxu0 %v1329
  %1580 = vmatprep.subr.mxu0 0.0
  %1581 = vmatpush2.msra.mxu0 %v1328
  %1582 = vmatprep.subr.mxu0 0.0
  %1583 = vmatpush2.msra.mxu0 %v1327
  %1584 = vmatprep.subr.mxu0 0.0
  %1585 = vmatpush2.msra.mxu0 %v1326
  %1586 = vmatprep.subr.mxu0 0.0
  %1587 = vmatpush2.msra.mxu0 %v1325
  %1588 = vmatprep.subr.mxu0 0.0
  %1589 = vmatpush2.msra.mxu0 %v1324
  %1590 = vmatprep.subr.mxu0 0.0
  %1591 = vmatpush2.msra.mxu0 %v1323
  %1592 = vmatprep.subr.mxu0 0.0
  %1593 = vmatpush2.msra.mxu0 %v1322
  %1594 = vmatprep.subr.mxu0 0.0
  %1595 = vmatpush2.msra.mxu0 %v1321
  %1596 = vmatprep.subr.mxu0 0.0
  %1597 = vmatpush2.msra.mxu0 %v1320
  %1598 = vmatprep.subr.mxu0 0.0
  %1599 = vmatpush2.msra.mxu0 %v1319
  %1600 = vmatprep.subr.mxu0 0.0
  %1601 = vmatpush2.msra.mxu0 %v1318
  %1602 = vmatprep.mubr.f32.mxu0 %v1233
  %1603 = vmatmul.mubr.f32.gmra.mxu0 %v1232
  %v1604 = vpop.f32.mrf.mxu0
  %v1605 = vadd.f32 %v1535, %v1604
  %v1606 = vpop.f32.mrf.mxu0
  %1607 = vdwg.mxu0
  %1608 = vmatprep.subr.mxu0 0.0
  %1609 = vmatpush1.msra.mxu0 %v1349
  %1610 = vmatprep.subr.mxu0 0.0
  %1611 = vmatpush1.msra.mxu0 %v1348
  %1612 = vmatprep.subr.mxu0 0.0
  %1613 = vmatpush1.msra.mxu0 %v1347
  %1614 = vmatprep.subr.mxu0 0.0
  %1615 = vmatpush1.msra.mxu0 %v1346
  %1616 = vmatprep.subr.mxu0 0.0
  %1617 = vmatpush1.msra.mxu0 %v1345
  %1618 = vmatprep.subr.mxu0 0.0
  %1619 = vmatpush1.msra.mxu0 %v1344
  %1620 = vmatprep.subr.mxu0 0.0
  %1621 = vmatpush1.msra.mxu0 %v1343
  %1622 = vmatprep.subr.mxu0 0.0
  %1623 = vmatpush1.msra.mxu0 %v1342
  %1624 = vmatprep.subr.mxu0 0.0
  %1625 = vmatpush1.msra.mxu0 %v1341
  %1626 = vmatprep.subr.mxu0 0.0
  %1627 = vmatpush1.msra.mxu0 %v1340
  %1628 = vmatprep.subr.mxu0 0.0
  %1629 = vmatpush1.msra.mxu0 %v1339
  %1630 = vmatprep.subr.mxu0 0.0
  %1631 = vmatpush1.msra.mxu0 %v1338
  %1632 = vmatprep.subr.mxu0 0.0
  %1633 = vmatpush1.msra.mxu0 %v1337
  %1634 = vmatprep.subr.mxu0 0.0
  %1635 = vmatpush1.msra.mxu0 %v1336
  %1636 = vmatprep.subr.mxu0 0.0
  %1637 = vmatpush1.msra.mxu0 %v1335
  %1638 = vmatprep.subr.mxu0 0.0
  %1639 = vmatpush1.msra.mxu0 %v1334
  %1640 = vmatprep.subr.mxu0 0.0
  %1641 = vmatpush2.msra.mxu0 %v1365
  %1642 = vmatprep.subr.mxu0 0.0
  %1643 = vmatpush2.msra.mxu0 %v1364
  %1644 = vmatprep.subr.mxu0 0.0
  %1645 = vmatpush2.msra.mxu0 %v1363
  %1646 = vmatprep.subr.mxu0 0.0
  %1647 = vmatpush2.msra.mxu0 %v1362
  %1648 = vmatprep.subr.mxu0 0.0
  %1649 = vmatpush2.msra.mxu0 %v1361
  %1650 = vmatprep.subr.mxu0 0.0
  %1651 = vmatpush2.msra.mxu0 %v1360
  %1652 = vmatprep.subr.mxu0 0.0
  %1653 = vmatpush2.msra.mxu0 %v1359
  %1654 = vmatprep.subr.mxu0 0.0
  %1655 = vmatpush2.msra.mxu0 %v1358
  %1656 = vmatprep.subr.mxu0 0.0
  %1657 = vmatpush2.msra.mxu0 %v1357
  %1658 = vmatprep.subr.mxu0 0.0
  %1659 = vmatpush2.msra.mxu0 %v1356
  %1660 = vmatprep.subr.mxu0 0.0
  %1661 = vmatpush2.msra.mxu0 %v1355
  %1662 = vmatprep.subr.mxu0 0.0
  %1663 = vmatpush2.msra.mxu0 %v1354
  %1664 = vmatprep.subr.mxu0 0.0
  %1665 = vmatpush2.msra.mxu0 %v1353
  %1666 = vmatprep.subr.mxu0 0.0
  %1667 = vmatpush2.msra.mxu0 %v1352
  %1668 = vmatprep.subr.mxu0 0.0
  %1669 = vmatpush2.msra.mxu0 %v1351
  %1670 = vmatprep.subr.mxu0 0.0
  %1671 = vmatpush2.msra.mxu0 %v1350
  %1672 = vmatprep.mubr.f32.mxu0 %v1235
  %1673 = vmatmul.mubr.f32.gmra.mxu0 %v1234
  %v1674 = vpop.f32.mrf.mxu0
  %v1675 = vadd.f32 %v1605, %v1674
  %v1676 = vpop.f32.mrf.mxu0
  %1677 = vdwg.mxu0
  %1678 = vmatprep.subr.mxu0 0.0
  %1679 = vmatpush1.msra.mxu0 %v1381
  %1680 = vmatprep.subr.mxu0 0.0
  %1681 = vmatpush1.msra.mxu0 %v1380
  %1682 = vmatprep.subr.mxu0 0.0
  %1683 = vmatpush1.msra.mxu0 %v1379
  %1684 = vmatprep.subr.mxu0 0.0
  %1685 = vmatpush1.msra.mxu0 %v1378
  %1686 = vmatprep.subr.mxu0 0.0
  %1687 = vmatpush1.msra.mxu0 %v1377
  %1688 = vmatprep.subr.mxu0 0.0
  %1689 = vmatpush1.msra.mxu0 %v1376
  %1690 = vmatprep.subr.mxu0 0.0
  %1691 = vmatpush1.msra.mxu0 %v1375
  %1692 = vmatprep.subr.mxu0 0.0
  %1693 = vmatpush1.msra.mxu0 %v1374
  %1694 = vmatprep.subr.mxu0 0.0
  %1695 = vmatpush1.msra.mxu0 %v1373
  %1696 = vmatprep.subr.mxu0 0.0
  %1697 = vmatpush1.msra.mxu0 %v1372
  %1698 = vmatprep.subr.mxu0 0.0
  %1699 = vmatpush1.msra.mxu0 %v1371
  %1700 = vmatprep.subr.mxu0 0.0
  %1701 = vmatpush1.msra.mxu0 %v1370
  %1702 = vmatprep.subr.mxu0 0.0
  %1703 = vmatpush1.msra.mxu0 %v1369
  %1704 = vmatprep.subr.mxu0 0.0
  %1705 = vmatpush1.msra.mxu0 %v1368
  %1706 = vmatprep.subr.mxu0 0.0
  %1707 = vmatpush1.msra.mxu0 %v1367
  %1708 = vmatprep.subr.mxu0 0.0
  %1709 = vmatpush1.msra.mxu0 %v1366
  %1710 = vmatprep.subr.mxu0 0.0
  %1711 = vmatpush2.msra.mxu0 %v1397
  %1712 = vmatprep.subr.mxu0 0.0
  %1713 = vmatpush2.msra.mxu0 %v1396
  %1714 = vmatprep.subr.mxu0 0.0
  %1715 = vmatpush2.msra.mxu0 %v1395
  %1716 = vmatprep.subr.mxu0 0.0
  %1717 = vmatpush2.msra.mxu0 %v1394
  %1718 = vmatprep.subr.mxu0 0.0
  %1719 = vmatpush2.msra.mxu0 %v1393
  %1720 = vmatprep.subr.mxu0 0.0
  %1721 = vmatpush2.msra.mxu0 %v1392
  %1722 = vmatprep.subr.mxu0 0.0
  %1723 = vmatpush2.msra.mxu0 %v1391
  %1724 = vmatprep.subr.mxu0 0.0
  %1725 = vmatpush2.msra.mxu0 %v1390
  %1726 = vmatprep.subr.mxu0 0.0
  %1727 = vmatpush2.msra.mxu0 %v1389
  %1728 = vmatprep.subr.mxu0 0.0
  %1729 = vmatpush2.msra.mxu0 %v1388
  %1730 = vmatprep.subr.mxu0 0.0
  %1731 = vmatpush2.msra.mxu0 %v1387
  %1732 = vmatprep.subr.mxu0 0.0
  %1733 = vmatpush2.msra.mxu0 %v1386
  %1734 = vmatprep.subr.mxu0 0.0
  %1735 = vmatpush2.msra.mxu0 %v1385
  %1736 = vmatprep.subr.mxu0 0.0
  %1737 = vmatpush2.msra.mxu0 %v1384
  %1738 = vmatprep.subr.mxu0 0.0
  %1739 = vmatpush2.msra.mxu0 %v1383
  %1740 = vmatprep.subr.mxu0 0.0
  %1741 = vmatpush2.msra.mxu0 %v1382
  %1742 = vmatprep.mubr.f32.mxu0 %v1237
  %1743 = vmatmul.mubr.f32.gmra.mxu0 %v1236
  %v1744 = vpop.f32.mrf.mxu0
  %v1745 = vadd.f32 %v1675, %v1744
  %v1746 = vpop.f32.mrf.mxu0
  %1747 = vdwg.mxu0
  %v1748 = vadd.f32 %v1225, %v1745
  %v1749 = vmax.f32 %v1748, 0.0
  %v1750 = vld [vmem:[%s11] sm:$0xff]
  %v1751 = vld [vmem:[%s11 + $0x8] sm:$0xff]
  %v1752 = vld [vmem:[%s11 + $0x10] sm:$0xff]
  %v1753 = vld [vmem:[%s11 + $0x18] sm:$0xff]
  %v1754 = vld [vmem:[%s11 + $0x20] sm:$0xff]
  %v1755 = vld [vmem:[%s11 + $0x28] sm:$0xff]
  %v1756 = vld [vmem:[%s11 + $0x30] sm:$0xff]
  %v1757 = vld [vmem:[%s11 + $0x38] sm:$0xff]
  %v1758 = vld [vmem:[%s11 + $0x40] sm:$0xff]
  %v1759 = vld [vmem:[%s11 + $0x48] sm:$0xff]
  %v1760 = vld [vmem:[%s11 + $0x50] sm:$0xff]
  %v1761 = vld [vmem:[%s11 + $0x58] sm:$0xff]
  %v1762 = vld [vmem:[%s11 + $0x60] sm:$0xff]
  %v1763 = vld [vmem:[%s11 + $0x68] sm:$0xff]
  %v1764 = vld [vmem:[%s11 + $0x70] sm:$0xff]
  %v1765 = vld [vmem:[%s11 + $0x78] sm:$0xff]
  %v1766 = vld [vmem:[%s12] sm:$0x1]
  %v1768 = vlaneseq
  %v1769 = vshrl.u32 %v1768, 7
  %v1770 = vsub.s32 0, %v1769
  %v1771 = vrot.slane %v1766, %v1770
  %1773 = vmatprep.subr.mxu0 0.0
  %1774 = vmatpush1.msra.mxu0 %v1765
  %1775 = vmatprep.subr.mxu0 0.0
  %1776 = vmatpush1.msra.mxu0 %v1764
  %1777 = vmatprep.subr.mxu0 0.0
  %1778 = vmatpush1.msra.mxu0 %v1763
  %1779 = vmatprep.subr.mxu0 0.0
  %1780 = vmatpush1.msra.mxu0 %v1762
  %1781 = vmatprep.subr.mxu0 0.0
  %1782 = vmatpush1.msra.mxu0 %v1761
  %1783 = vmatprep.subr.mxu0 0.0
  %1784 = vmatpush1.msra.mxu0 %v1760
  %1785 = vmatprep.subr.mxu0 0.0
  %1786 = vmatpush1.msra.mxu0 %v1759
  %1787 = vmatprep.subr.mxu0 0.0
  %1788 = vmatpush1.msra.mxu0 %v1758
  %1789 = vmatprep.subr.mxu0 0.0
  %1790 = vmatpush1.msra.mxu0 %v1757
  %1791 = vmatprep.subr.mxu0 0.0
  %1792 = vmatpush1.msra.mxu0 %v1756
  %1793 = vmatprep.subr.mxu0 0.0
  %1794 = vmatpush1.msra.mxu0 %v1755
  %1795 = vmatprep.subr.mxu0 0.0
  %1796 = vmatpush1.msra.mxu0 %v1754
  %1797 = vmatprep.subr.mxu0 0.0
  %1798 = vmatpush1.msra.mxu0 %v1753
  %1799 = vmatprep.subr.mxu0 0.0
  %1800 = vmatpush1.msra.mxu0 %v1752
  %1801 = vmatprep.subr.mxu0 0.0
  %1802 = vmatpush1.msra.mxu0 %v1751
  %1803 = vmatprep.subr.mxu0 0.0
  %1804 = vmatpush1.msra.mxu0 %v1750
  %1805 = vmatprep.subr.mxu0 0.0
  %1806 = vmatpush2.msra.mxu0 0.0
  %1807 = vmatprep.subr.mxu0 0.0
  %1808 = vmatpush2.msra.mxu0 0.0
  %1809 = vmatprep.subr.mxu0 0.0
  %1810 = vmatpush2.msra.mxu0 0.0
  %1811 = vmatprep.subr.mxu0 0.0
  %1812 = vmatpush2.msra.mxu0 0.0
  %1813 = vmatprep.subr.mxu0 0.0
  %1814 = vmatpush2.msra.mxu0 0.0
  %1815 = vmatprep.subr.mxu0 0.0
  %1816 = vmatpush2.msra.mxu0 0.0
  %1817 = vmatprep.subr.mxu0 0.0
  %1818 = vmatpush2.msra.mxu0 0.0
  %1819 = vmatprep.subr.mxu0 0.0
  %1820 = vmatpush2.msra.mxu0 0.0
  %1821 = vmatprep.subr.mxu0 0.0
  %1822 = vmatpush2.msra.mxu0 0.0
  %1823 = vmatprep.subr.mxu0 0.0
  %1824 = vmatpush2.msra.mxu0 0.0
  %1825 = vmatprep.subr.mxu0 0.0
  %1826 = vmatpush2.msra.mxu0 0.0
  %1827 = vmatprep.subr.mxu0 0.0
  %1828 = vmatpush2.msra.mxu0 0.0
  %1829 = vmatprep.subr.mxu0 0.0
  %1830 = vmatpush2.msra.mxu0 0.0
  %1831 = vmatprep.subr.mxu0 0.0
  %1832 = vmatpush2.msra.mxu0 0.0
  %1833 = vmatprep.subr.mxu0 0.0
  %1834 = vmatpush2.msra.mxu0 0.0
  %1835 = vmatprep.subr.mxu0 0.0
  %1836 = vmatpush2.msra.mxu0 0.0
  %1837 = vmatprep.mubr.f32.mxu0 0.0
  %1838 = vmatmul.mubr.f32.gmra.mxu0 %v1749
  %v1839 = vpop.f32.mrf.mxu0
  %v1840 = vadd.f32 %v1771, %v1839
  %v1841 = vpop.f32.mrf.mxu0
  %1842 = vdwg.mxu0
  %vm1843 = vcmask 31744
  %1844 = vst.msk [vmem:[%s13] sm:$0xff] %vm1843, %v1840
  // Predicated region
  $region54: #{qnetwork_forward.1} parent=0 // pred_check
    _
  $region55: #{qnetwork_forward.1} parent=0 // pred_check_branch
    %1846 = sbr.rel (0) target = $region57
  $region56: #{qnetwork_forward.1} parent=0 // pred_region
    _
  $region57: #{qnetwork_forward.1} parent=0 // pred_fallthru
    _
  // Predicated region
  $region58: #{qnetwork_forward.1} parent=0 // pred_check
    _
  $region59: #{qnetwork_forward.1} parent=0 // pred_check_branch
    %1848 = sbr.rel (0) target = $region61
  $region60: #{qnetwork_forward.1} parent=0 // pred_region
    _
  $region61: #{qnetwork_forward.1} parent=0 // pred_fallthru
    _

</llo_original>
